<compile_context>
chip_gen: v7x
topology: tpu7x:2x2x1
jax: 0.10.0
libtpu: 0.0.40
codegen_flags: <defaults>
</compile_context>

<pallas_src>
import functools

import jax
import jax.numpy as jnp
import numpy as np
from jax import lax
from jax.experimental import pallas as pl
from jax.experimental.pallas import tpu as pltpu

INPUT_SIZE = 5
HIDDEN_SIZE = 50
NUM_LAYERS = 2   # hard-coded as two explicit layers in the kernel (matches module default)
OUTPUT_SIZE = 1


def _round_up(n, m):
    return ((n + m - 1) // m) * m


HP = _round_up(HIDDEN_SIZE, 64)    # padded hidden size: 50 -> 64
GP = 4 * HP                        # fused gate width:   200 -> 256
IP = _round_up(INPUT_SIZE, 8)      # padded input size:  5 -> 8
OP = _round_up(OUTPUT_SIZE, 128)   # padded fc output:   1 -> 128 (lane-dense store)


def _lstm_kernel(x_ref,       # (T*Bp, IP)     bf16  time-major flattened input
                 wih0_ref,    # (IP, GP)       bf16
                 b0_ref,      # (1, GP)        f32   (= b_ih0 + b_hh0)
                 whhcat_ref,  # (2*HP, 2*GP)   bf16  block-diag [whh0 ⊕ whh1]
                 wih1_ref,    # (HP, GP)       bf16
                 b1_ref,      # (1, GP)        f32   (= b_ih1 + b_hh1)
                 wfc_ref,     # (HP, OP)       bf16
                 bfc_ref,     # (1, OP)        f32
                 out_ref,     # (Bp, OP)       f32
                 pre0_ref):   # (T*Bp, GP)     f32   VMEM scratch (layer-0 pre-gates)
    Bp = out_ref.shape[0]
    TB, G = pre0_ref.shape
    T = TB // Bp
    Hp = G // 4

    # Layer-0 input projection for ALL timesteps at once (no serial dependency): one
    # (T*Bp, IP) @ (IP, GP) dot into VMEM scratch, off the recurrent chain.
    pre0_ref[...] = (
        jnp.dot(x_ref[...], wih0_ref[...], preferred_element_type=jnp.float32)
        + b0_ref[...])

    # Hoisted constants (built once; not re-materialized inside the unrolled loop).
    col = lax.broadcasted_iota(jnp.int32, (Bp, G), 1)
    is_g = (col >= 2 * Hp) & (col < 3 * Hp)           # cell-candidate gate lanes
    # sigmoid(x) = 0.5*tanh(0.5*x) + 0.5 ; tanh(x) = 1.0*tanh(1.0*x) + 0.0
    scale = jnp.where(is_g, jnp.float32(1.0), jnp.float32(0.5))   # pre- and post-scale
    shift = jnp.where(is_g, jnp.float32(0.0), jnp.float32(0.5))
    b1b = jnp.broadcast_to(b1_ref[...], (Bp, G))

    def activate(z, c):
        # One EUP tanh slab over (Bp, G) instead of sigmoid-slab + tanh-slab.
        act = jnp.tanh(z * scale) * scale + shift
        i = act[:, 0 * Hp:1 * Hp]
        f = act[:, 1 * Hp:2 * Hp]
        g = act[:, 2 * Hp:3 * Hp]
        o = act[:, 3 * Hp:4 * Hp]
        c_new = f * c + i * g
        h_new = o * jnp.tanh(c_new)
        return h_new, c_new

    zeros_h = jnp.zeros((Bp, Hp), jnp.float32)
    c0, c1, h1 = zeros_h, zeros_h, zeros_h
    hcat = jnp.zeros((Bp, 2 * Hp), jnp.float32)       # packed [h0 | h1] state

    # T is static -> fully unrolled recurrence (LLO can overlap step t+1's MXU pushes with
    # step t's EUP/VPU tail). Weight refs are indexed at use sites so Mosaic feeds the MXU
    # straight from VMEM instead of pinning ~40 bf16 weight vregs across the chain.
    for t in range(T):
        # ONE fused K=128 recurrent dot for both layers (block-diagonal weight).
        zrec = jnp.dot(hcat.astype(jnp.bfloat16), whhcat_ref[...],
                       preferred_element_type=jnp.float32)          # (Bp, 2*G)
        z0 = pre0_ref[pl.ds(t * Bp, Bp), :] + zrec[:, :G]
        h0, c0 = activate(z0, c0)
        # Layer 1: single expression summing the in-chain dot + recurrent part + bias
        # (lets v7x accumulate in the MRB).
        z1 = (jnp.dot(h0.astype(jnp.bfloat16), wih1_ref[...],
                      preferred_element_type=jnp.float32)
              + zrec[:, G:] + b1b)
        h1, c1 = activate(z1, c1)
        hcat = jnp.concatenate([h0, h1], axis=-1)

    # fc head on the last hidden state; OP=128 -> lane-dense unmasked store.
    out_ref[...] = (jnp.dot(h1.astype(jnp.bfloat16), wfc_ref[...],
                            preferred_element_type=jnp.float32)
                    + bfc_ref[...])


@functools.partial(jax.jit, static_argnames=("output_size",))
def lstm_predictor_forward(x, packed, *, output_size=OUTPUT_SIZE):
    """x: (B, T, I) float32, batch_first (PyTorch convention). Returns (B, output_size) f32."""
    B, T, I = x.shape
    Bp = _round_up(B, 8)                      # full sublane tile: unmasked per-step ops
    Ip = packed["wih0"].shape[0]

    # Only a tiny layout prep stays in XLA: time-major, batch/input zero-pad, flatten.
    x_tm = jnp.transpose(x, (1, 0, 2))                              # (T, B, I)
    x_tm = jnp.pad(x_tm, ((0, 0), (0, Bp - B), (0, Ip - I)))        # (T, Bp, IP)
    x2 = x_tm.reshape(T * Bp, Ip).astype(jnp.bfloat16)              # (T*Bp, IP)

    vmem = pl.BlockSpec(memory_space=pltpu.MemorySpace.VMEM)
    # Single grid point: total residency ~300 KB, fits every generation's VMEM with the
    # default scoped limit. If B grows, add a leading batch grid axis (blocks of >=8 rows)
    # with dimension_semantics=("parallel",) to use both v7x TensorCores.
    out_padded = pl.pallas_call(
        _lstm_kernel,
        out_shape=jax.ShapeDtypeStruct((Bp, OP), jnp.float32),
        in_specs=[vmem] * 8,
        out_specs=vmem,
        scratch_shapes=[pltpu.VMEM((T * Bp, GP), jnp.float32)],
    )(x2, packed["wih0"], packed["b0"], packed["whhcat"], packed["wih1"],
      packed["b1"], packed["wfc"], packed["bfc"])

    return out_padded[:B, :output_size]


def init_params(key, input_size=INPUT_SIZE, hidden_size=HIDDEN_SIZE, output_size=OUTPUT_SIZE):
    """Deterministic synthetic init, PyTorch-style uniform(-1/sqrt(H), 1/sqrt(H)).

    Logical (unpadded) layout, gates fused along the last axis in torch order i,f,g,o:
      wih0 (I, 4H), whh0 (H, 4H), b0 (1, 4H) = b_ih+b_hh, wih1/whh1 (H, 4H), b1 (1, 4H),
      wfc (H, O), bfc (1, O).
    NOTE: real PyTorch checkpoints store weight_ih/hh as (4H, in) and fc.weight as (O, H);
    transpose before feeding them here.
    """
    k = 1.0 / np.sqrt(hidden_size)
    keys = jax.random.split(key, 10)

    def u(kk, shape):
        return jax.random.uniform(kk, shape, jnp.float32, minval=-k, maxval=k)

    H, I, O = hidden_size, input_size, output_size
    return {
        "wih0": u(keys[0], (I, 4 * H)),
        "whh0": u(keys[1], (H, 4 * H)),
        "b0":   u(keys[2], (1, 4 * H)) + u(keys[3], (1, 4 * H)),
        "wih1": u(keys[4], (H, 4 * H)),
        "whh1": u(keys[5], (H, 4 * H)),
        "b1":   u(keys[6], (1, 4 * H)) + u(keys[7], (1, 4 * H)),
        "wfc":  u(keys[8], (H, O)),
        "bfc":  u(keys[9], (1, O)),
    }


def pack_params(p, input_size=INPUT_SIZE, hidden_size=HIDDEN_SIZE, output_size=OUTPUT_SIZE):
    """Pad to the kernel layout (per-gate H->HP, I->IP, O->OP), build the block-diagonal
    fused recurrent weight, and pre-cast MXU-input weights to bf16 (f32 accumulation)."""
    H, O = hidden_size, output_size

    def pad_gates_last(w):                      # (..., 4H) -> (..., 4*HP), zero-pad each gate
        lead = w.shape[:-1]
        w4 = w.reshape(*lead, 4, H)
        w4 = jnp.pad(w4, [(0, 0)] * len(lead) + [(0, 0), (0, HP - H)])
        return w4.reshape(*lead, 4 * HP)

    def pad_rows(w, rows):                      # (r, ...) -> (rows, ...)
        return jnp.pad(w, [(0, rows - w.shape[0])] + [(0, 0)] * (w.ndim - 1))

    whh0 = pad_rows(pad_gates_last(p["whh0"]), HP)                   # (HP, GP)
    whh1 = pad_rows(pad_gates_last(p["whh1"]), HP)                   # (HP, GP)
    whhcat = jnp.zeros((2 * HP, 2 * GP), jnp.float32)
    whhcat = whhcat.at[:HP, :GP].set(whh0)
    whhcat = whhcat.at[HP:, GP:].set(whh1)                           # block-diag [whh0 ⊕ whh1]

    packed = {
        "wih0":   pad_rows(pad_gates_last(p["wih0"]), IP).astype(jnp.bfloat16),   # (IP, GP)
        "b0":     pad_gates_last(p["b0"]),                                        # (1, GP) f32
        "whhcat": whhcat.astype(jnp.bfloat16),                                    # (128, 512)
        "wih1":   pad_rows(pad_gates_last(p["wih1"]), HP).astype(jnp.bfloat16),   # (HP, GP)
        "b1":     pad_gates_last(p["b1"]),                                        # (1, GP) f32
        "wfc":    jnp.pad(p["wfc"], [(0, HP - H), (0, OP - O)]).astype(jnp.bfloat16),
        "bfc":    jnp.pad(p["bfc"], [(0, 0), (0, OP - O)]),                       # (1, OP) f32
    }

    # Padded-lane invariant guards: padded h/c columns stay identically 0 only if padded
    # bias lanes and padded weight rows are zero (and the initial state is zero).
    assert bool(jnp.all(packed["b0"].reshape(4, HP)[:, H:] == 0))
    assert bool(jnp.all(packed["b1"].reshape(4, HP)[:, H:] == 0))
    assert bool(jnp.all(packed["whhcat"][H:HP, :] == 0))
    assert bool(jnp.all(packed["whhcat"][HP + H:, :] == 0))
    assert bool(jnp.all(packed["wih1"][H:, :] == 0))
    assert bool(jnp.all(packed["wfc"][H:, :] == 0))
    return packed


def reference_forward(x, params, *, hidden_size=HIDDEN_SIZE, dot_dtype=jnp.float32):
    """Pure-JAX reference (lax.scan). dot_dtype=bf16 mirrors the kernel's precision choice
    (bf16 MXU inputs, f32 accumulation); dot_dtype=f32 is the torch-f32-equivalent check."""
    B, T, I = x.shape
    H = hidden_size

    def mm(a, b):
        return jnp.dot(a.astype(dot_dtype), b.astype(dot_dtype),
                       preferred_element_type=jnp.float32,
                       precision=jax.lax.Precision.HIGHEST)

    def cell(z, c):
        i = jax.nn.sigmoid(z[:, 0 * H:1 * H])
        f = jax.nn.sigmoid(z[:, 1 * H:2 * H])
        g = jnp.tanh(z[:, 2 * H:3 * H])
        o = jax.nn.sigmoid(z[:, 3 * H:4 * H])
        c_new = f * c + i * g
        return o * jnp.tanh(c_new), c_new

    def step(carry, x_t):
        h0, c0, h1, c1 = carry
        h0, c0 = cell(mm(x_t, params["wih0"]) + params["b0"] + mm(h0, params["whh0"]), c0)
        h1, c1 = cell(mm(h0, params["wih1"]) + params["b1"] + mm(h1, params["whh1"]), c1)
        return (h0, c0, h1, c1), None

    zeros = jnp.zeros((B, H), jnp.float32)
    (_, _, h1, _), _ = lax.scan(step, (zeros, zeros, zeros, zeros),
                                jnp.transpose(x, (1, 0, 2)))
    return mm(h1, params["wfc"]) + params["bfc"]


if __name__ == "__main__":
    key = jax.random.PRNGKey(0)
    k_param, k_x = jax.random.split(key)

    B, T = 2, 8
    x = jax.random.normal(k_x, (B, T, INPUT_SIZE), jnp.float32)
    params = init_params(k_param)
    packed = pack_params(params)

    out = lstm_predictor_forward(x, packed, output_size=OUTPUT_SIZE)
    out = jax.block_until_ready(out)
    assert out.shape == (B, OUTPUT_SIZE)

    # 1) Matched-precision reference (bf16 at every MXU boundary, f32 accumulation): tight.
    ref_matched = reference_forward(x, params, dot_dtype=jnp.bfloat16)
    np.testing.assert_allclose(np.asarray(out), np.asarray(ref_matched), rtol=2e-3, atol=2e-3)

    # 2) Full-f32 (torch-equivalent) reference: looser tolerance absorbs bf16 input drift.
    ref_f32 = reference_forward(x, params, dot_dtype=jnp.float32)
    np.testing.assert_allclose(np.asarray(out), np.asarray(ref_f32), rtol=5e-2, atol=3e-2)

    print("KERNEL_OK")
</pallas_src>

<mosaic_0001>
module attributes {stable_mosaic.version = 11 : i64} {
  func.func @_lstm_kernel(%arg0: memref<64x8xbf16, #tpu.memory_space<vmem>>, %arg1: memref<8x256xbf16, #tpu.memory_space<vmem>>, %arg2: memref<1x256xf32, #tpu.memory_space<vmem>>, %arg3: memref<128x512xbf16, #tpu.memory_space<vmem>>, %arg4: memref<64x256xbf16, #tpu.memory_space<vmem>>, %arg5: memref<1x256xf32, #tpu.memory_space<vmem>>, %arg6: memref<64x128xbf16, #tpu.memory_space<vmem>>, %arg7: memref<1x128xf32, #tpu.memory_space<vmem>>, %arg8: memref<8x128xf32, #tpu.memory_space<vmem>>, %arg9: memref<64x256xf32, #tpu.memory_space<vmem>>) attributes {dimension_semantics = [], scalar_prefetch = 0 : i64, scratch_operands = 1 : i64, tpu.core_type = #tpu.core_type<tc>} {
    %c0 = arith.constant 0 : index
    %c0_0 = arith.constant 0 : index
    %0 = vector.load %arg0[%c0, %c0_0] : memref<64x8xbf16, #tpu.memory_space<vmem>>, vector<64x8xbf16>
    %c0_1 = arith.constant 0 : index
    %c0_2 = arith.constant 0 : index
    %1 = vector.load %arg1[%c0_1, %c0_2] : memref<8x256xbf16, #tpu.memory_space<vmem>>, vector<8x256xbf16>
    %cst = arith.constant dense<0.000000e+00> : vector<64x256xf32>
    %2 = tpu.matmul %0, %1, %cst {dimension_numbers = #tpu.dot_dimension_numbers<[1], [0], [0], [1], [0, 0, 1, 1], [], []>} : vector<64x8xbf16>, vector<8x256xbf16>, vector<64x256xf32> -> vector<64x256xf32>
    %c0_3 = arith.constant 0 : index
    %c0_4 = arith.constant 0 : index
    %3 = vector.load %arg2[%c0_3, %c0_4] : memref<1x256xf32, #tpu.memory_space<vmem>>, vector<1x256xf32>
    %4 = vector.broadcast %3 : vector<1x256xf32> to vector<64x256xf32>
    %5 = arith.addf %2, %4 : vector<64x256xf32>
    %c0_5 = arith.constant 0 : index
    %c0_6 = arith.constant 0 : index
    %6 = vector.load %arg9[%c0_5, %c0_6] : memref<64x256xf32, #tpu.memory_space<vmem>>, vector<64x256xf32>
    tpu.vector_store %arg9[%c0_5, %c0_6], %5 {strides = array<i32>} : memref<64x256xf32, #tpu.memory_space<vmem>>, vector<64x256xf32>,
    %7 = tpu.iota {dimensions = array<i32: 1>} : vector<8x256xi32>
    %c128_i32 = arith.constant 128 : i32
    %8 = vector.broadcast %c128_i32 : i32 to vector<8x256xi32>
    %9 = arith.cmpi sge, %7, %8 : vector<8x256xi32>
    %c192_i32 = arith.constant 192 : i32
    %10 = vector.broadcast %c192_i32 : i32 to vector<8x256xi32>
    %11 = arith.cmpi slt, %7, %10 : vector<8x256xi32>
    %12 = arith.andi %9, %11 : vector<8x256xi1>
    %cst_7 = arith.constant 1.000000e+00 : f32
    %cst_8 = arith.constant 5.000000e-01 : f32
    %13 = vector.broadcast %cst_7 : f32 to vector<8x256xf32>
    %14 = vector.broadcast %cst_8 : f32 to vector<8x256xf32>
    %15 = arith.select %12, %13, %14 : vector<8x256xi1>, vector<8x256xf32>
    %cst_9 = arith.constant 0.000000e+00 : f32
    %cst_10 = arith.constant 5.000000e-01 : f32
    %16 = vector.broadcast %cst_9 : f32 to vector<8x256xf32>
    %17 = vector.broadcast %cst_10 : f32 to vector<8x256xf32>
    %18 = arith.select %12, %16, %17 : vector<8x256xi1>, vector<8x256xf32>
    %c0_11 = arith.constant 0 : index
    %c0_12 = arith.constant 0 : index
    %19 = vector.load %arg5[%c0_11, %c0_12] : memref<1x256xf32, #tpu.memory_space<vmem>>, vector<1x256xf32>
    %20 = vector.shape_cast %19 : vector<1x256xf32> to vector<1x256xf32>
    %21 = vector.broadcast %20 : vector<1x256xf32> to vector<8x256xf32>
    %cst_13 = arith.constant 0.000000e+00 : f32
    %22 = vector.broadcast %cst_13 : f32 to vector<8x64xf32>
    %cst_14 = arith.constant 0.000000e+00 : f32
    %23 = vector.broadcast %cst_14 : f32 to vector<8x128xf32>
    %24 = arith.truncf %23 : vector<8x128xf32> to vector<8x128xbf16>
    %c0_15 = arith.constant 0 : index
    %c0_16 = arith.constant 0 : index
    %25 = vector.load %arg3[%c0_15, %c0_16] : memref<128x512xbf16, #tpu.memory_space<vmem>>, vector<128x512xbf16>
    %cst_17 = arith.constant dense<0.000000e+00> : vector<8x512xf32>
    %26 = tpu.matmul %24, %25, %cst_17 {dimension_numbers = #tpu.dot_dimension_numbers<[1], [0], [0], [1], [0, 0, 1, 1], [], []>} : vector<8x128xbf16>, vector<128x512xbf16>, vector<8x512xf32> -> vector<8x512xf32>
    %c0_18 = arith.constant 0 : index
    %c0_19 = arith.constant 0 : index
    %27 = vector.load %arg9[%c0_18, %c0_19] : memref<64x256xf32, #tpu.memory_space<vmem>>, vector<8x256xf32>
    %28 = vector.extract_strided_slice %26 {offsets = [0, 0], sizes = [8, 256], strides = [1, 1]} : vector<8x512xf32> to vector<8x256xf32>
    %29 = arith.addf %27, %28 : vector<8x256xf32>
    %30 = arith.mulf %29, %15 : vector<8x256xf32>
    %31 = math.tanh %30 : vector<8x256xf32>
    %32 = arith.mulf %31, %15 : vector<8x256xf32>
    %33 = arith.addf %32, %18 : vector<8x256xf32>
    %34 = vector.extract_strided_slice %33 {offsets = [0, 0], sizes = [8, 64], strides = [1, 1]} : vector<8x256xf32> to vector<8x64xf32>
    %35 = vector.extract_strided_slice %33 {offsets = [0, 64], sizes = [8, 64], strides = [1, 1]} : vector<8x256xf32> to vector<8x64xf32>
    %36 = vector.extract_strided_slice %33 {offsets = [0, 128], sizes = [8, 64], strides = [1, 1]} : vector<8x256xf32> to vector<8x64xf32>
    %37 = vector.extract_strided_slice %33 {offsets = [0, 192], sizes = [8, 64], strides = [1, 1]} : vector<8x256xf32> to vector<8x64xf32>
    %38 = arith.mulf %35, %22 : vector<8x64xf32>
    %39 = arith.mulf %34, %36 : vector<8x64xf32>
    %40 = arith.addf %38, %39 : vector<8x64xf32>
    %41 = math.tanh %40 : vector<8x64xf32>
    %42 = arith.mulf %37, %41 : vector<8x64xf32>
    %43 = arith.truncf %42 : vector<8x64xf32> to vector<8x64xbf16>
    %c0_20 = arith.constant 0 : index
    %c0_21 = arith.constant 0 : index
    %44 = vector.load %arg4[%c0_20, %c0_21] : memref<64x256xbf16, #tpu.memory_space<vmem>>, vector<64x256xbf16>
    %cst_22 = arith.constant dense<0.000000e+00> : vector<8x256xf32>
    %45 = tpu.matmul %43, %44, %cst_22 {dimension_numbers = #tpu.dot_dimension_numbers<[1], [0], [0], [1], [0, 0, 1, 1], [], []>} : vector<8x64xbf16>, vector<64x256xbf16>, vector<8x256xf32> -> vector<8x256xf32>
    %46 = vector.extract_strided_slice %26 {offsets = [0, 256], sizes = [8, 256], strides = [1, 1]} : vector<8x512xf32> to vector<8x256xf32>
    %47 = arith.addf %45, %46 : vector<8x256xf32>
    %48 = arith.addf %47, %21 : vector<8x256xf32>
    %49 = arith.mulf %48, %15 : vector<8x256xf32>
    %50 = math.tanh %49 : vector<8x256xf32>
    %51 = arith.mulf %50, %15 : vector<8x256xf32>
    %52 = arith.addf %51, %18 : vector<8x256xf32>
    %53 = vector.extract_strided_slice %52 {offsets = [0, 0], sizes = [8, 64], strides = [1, 1]} : vector<8x256xf32> to vector<8x64xf32>
    %54 = vector.extract_strided_slice %52 {offsets = [0, 64], sizes = [8, 64], strides = [1, 1]} : vector<8x256xf32> to vector<8x64xf32>
    %55 = vector.extract_strided_slice %52 {offsets = [0, 128], sizes = [8, 64], strides = [1, 1]} : vector<8x256xf32> to vector<8x64xf32>
    %56 = vector.extract_strided_slice %52 {offsets = [0, 192], sizes = [8, 64], strides = [1, 1]} : vector<8x256xf32> to vector<8x64xf32>
    %57 = arith.mulf %54, %22 : vector<8x64xf32>
    %58 = arith.mulf %53, %55 : vector<8x64xf32>
    %59 = arith.addf %57, %58 : vector<8x64xf32>
    %60 = math.tanh %59 : vector<8x64xf32>
    %61 = arith.mulf %56, %60 : vector<8x64xf32>
    %62 = tpu.concatenate %42, %61 in 1 : vector<8x64xf32>, vector<8x64xf32> -> vector<8x128xf32>
    %63 = arith.truncf %62 : vector<8x128xf32> to vector<8x128xbf16>
    %c0_23 = arith.constant 0 : index
    %c0_24 = arith.constant 0 : index
    %64 = vector.load %arg3[%c0_23, %c0_24] : memref<128x512xbf16, #tpu.memory_space<vmem>>, vector<128x512xbf16>
    %cst_25 = arith.constant dense<0.000000e+00> : vector<8x512xf32>
    %65 = tpu.matmul %63, %64, %cst_25 {dimension_numbers = #tpu.dot_dimension_numbers<[1], [0], [0], [1], [0, 0, 1, 1], [], []>} : vector<8x128xbf16>, vector<128x512xbf16>, vector<8x512xf32> -> vector<8x512xf32>
    %c8 = arith.constant 8 : index
    %c0_26 = arith.constant 0 : index
    %66 = vector.load %arg9[%c8, %c0_26] : memref<64x256xf32, #tpu.memory_space<vmem>>, vector<8x256xf32>
    %67 = vector.extract_strided_slice %65 {offsets = [0, 0], sizes = [8, 256], strides = [1, 1]} : vector<8x512xf32> to vector<8x256xf32>
    %68 = arith.addf %66, %67 : vector<8x256xf32>
    %69 = arith.mulf %68, %15 : vector<8x256xf32>
    %70 = math.tanh %69 : vector<8x256xf32>
    %71 = arith.mulf %70, %15 : vector<8x256xf32>
    %72 = arith.addf %71, %18 : vector<8x256xf32>
    %73 = vector.extract_strided_slice %72 {offsets = [0, 0], sizes = [8, 64], strides = [1, 1]} : vector<8x256xf32> to vector<8x64xf32>
    %74 = vector.extract_strided_slice %72 {offsets = [0, 64], sizes = [8, 64], strides = [1, 1]} : vector<8x256xf32> to vector<8x64xf32>
    %75 = vector.extract_strided_slice %72 {offsets = [0, 128], sizes = [8, 64], strides = [1, 1]} : vector<8x256xf32> to vector<8x64xf32>
    %76 = vector.extract_strided_slice %72 {offsets = [0, 192], sizes = [8, 64], strides = [1, 1]} : vector<8x256xf32> to vector<8x64xf32>
    %77 = arith.mulf %74, %40 : vector<8x64xf32>
    %78 = arith.mulf %73, %75 : vector<8x64xf32>
    %79 = arith.addf %77, %78 : vector<8x64xf32>
    %80 = math.tanh %79 : vector<8x64xf32>
    %81 = arith.mulf %76, %80 : vector<8x64xf32>
    %82 = arith.truncf %81 : vector<8x64xf32> to vector<8x64xbf16>
    %c0_27 = arith.constant 0 : index
    %c0_28 = arith.constant 0 : index
    %83 = vector.load %arg4[%c0_27, %c0_28] : memref<64x256xbf16, #tpu.memory_space<vmem>>, vector<64x256xbf16>
    %cst_29 = arith.constant dense<0.000000e+00> : vector<8x256xf32>
    %84 = tpu.matmul %82, %83, %cst_29 {dimension_numbers = #tpu.dot_dimension_numbers<[1], [0], [0], [1], [0, 0, 1, 1], [], []>} : vector<8x64xbf16>, vector<64x256xbf16>, vector<8x256xf32> -> vector<8x256xf32>
    %85 = vector.extract_strided_slice %65 {offsets = [0, 256], sizes = [8, 256], strides = [1, 1]} : vector<8x512xf32> to vector<8x256xf32>
    %86 = arith.addf %84, %85 : vector<8x256xf32>
    %87 = arith.addf %86, %21 : vector<8x256xf32>
    %88 = arith.mulf %87, %15 : vector<8x256xf32>
    %89 = math.tanh %88 : vector<8x256xf32>
    %90 = arith.mulf %89, %15 : vector<8x256xf32>
    %91 = arith.addf %90, %18 : vector<8x256xf32>
    %92 = vector.extract_strided_slice %91 {offsets = [0, 0], sizes = [8, 64], strides = [1, 1]} : vector<8x256xf32> to vector<8x64xf32>
    %93 = vector.extract_strided_slice %91 {offsets = [0, 64], sizes = [8, 64], strides = [1, 1]} : vector<8x256xf32> to vector<8x64xf32>
    %94 = vector.extract_strided_slice %91 {offsets = [0, 128], sizes = [8, 64], strides = [1, 1]} : vector<8x256xf32> to vector<8x64xf32>
    %95 = vector.extract_strided_slice %91 {offsets = [0, 192], sizes = [8, 64], strides = [1, 1]} : vector<8x256xf32> to vector<8x64xf32>
    %96 = arith.mulf %93, %59 : vector<8x64xf32>
    %97 = arith.mulf %92, %94 : vector<8x64xf32>
    %98 = arith.addf %96, %97 : vector<8x64xf32>
    %99 = math.tanh %98 : vector<8x64xf32>
    %100 = arith.mulf %95, %99 : vector<8x64xf32>
    %101 = tpu.concatenate %81, %100 in 1 : vector<8x64xf32>, vector<8x64xf32> -> vector<8x128xf32>
    %102 = arith.truncf %101 : vector<8x128xf32> to vector<8x128xbf16>
    %c0_30 = arith.constant 0 : index
    %c0_31 = arith.constant 0 : index
    %103 = vector.load %arg3[%c0_30, %c0_31] : memref<128x512xbf16, #tpu.memory_space<vmem>>, vector<128x512xbf16>
    %cst_32 = arith.constant dense<0.000000e+00> : vector<8x512xf32>
    %104 = tpu.matmul %102, %103, %cst_32 {dimension_numbers = #tpu.dot_dimension_numbers<[1], [0], [0], [1], [0, 0, 1, 1], [], []>} : vector<8x128xbf16>, vector<128x512xbf16>, vector<8x512xf32> -> vector<8x512xf32>
    %c16 = arith.constant 16 : index
    %c0_33 = arith.constant 0 : index
    %105 = vector.load %arg9[%c16, %c0_33] : memref<64x256xf32, #tpu.memory_space<vmem>>, vector<8x256xf32>
    %106 = vector.extract_strided_slice %104 {offsets = [0, 0], sizes = [8, 256], strides = [1, 1]} : vector<8x512xf32> to vector<8x256xf32>
    %107 = arith.addf %105, %106 : vector<8x256xf32>
    %108 = arith.mulf %107, %15 : vector<8x256xf32>
    %109 = math.tanh %108 : vector<8x256xf32>
    %110 = arith.mulf %109, %15 : vector<8x256xf32>
    %111 = arith.addf %110, %18 : vector<8x256xf32>
    %112 = vector.extract_strided_slice %111 {offsets = [0, 0], sizes = [8, 64], strides = [1, 1]} : vector<8x256xf32> to vector<8x64xf32>
    %113 = vector.extract_strided_slice %111 {offsets = [0, 64], sizes = [8, 64], strides = [1, 1]} : vector<8x256xf32> to vector<8x64xf32>
    %114 = vector.extract_strided_slice %111 {offsets = [0, 128], sizes = [8, 64], strides = [1, 1]} : vector<8x256xf32> to vector<8x64xf32>
    %115 = vector.extract_strided_slice %111 {offsets = [0, 192], sizes = [8, 64], strides = [1, 1]} : vector<8x256xf32> to vector<8x64xf32>
    %116 = arith.mulf %113, %79 : vector<8x64xf32>
    %117 = arith.mulf %112, %114 : vector<8x64xf32>
    %118 = arith.addf %116, %117 : vector<8x64xf32>
    %119 = math.tanh %118 : vector<8x64xf32>
    %120 = arith.mulf %115, %119 : vector<8x64xf32>
    %121 = arith.truncf %120 : vector<8x64xf32> to vector<8x64xbf16>
    %c0_34 = arith.constant 0 : index
    %c0_35 = arith.constant 0 : index
    %122 = vector.load %arg4[%c0_34, %c0_35] : memref<64x256xbf16, #tpu.memory_space<vmem>>, vector<64x256xbf16>
    %cst_36 = arith.constant dense<0.000000e+00> : vector<8x256xf32>
    %123 = tpu.matmul %121, %122, %cst_36 {dimension_numbers = #tpu.dot_dimension_numbers<[1], [0], [0], [1], [0, 0, 1, 1], [], []>} : vector<8x64xbf16>, vector<64x256xbf16>, vector<8x256xf32> -> vector<8x256xf32>
    %124 = vector.extract_strided_slice %104 {offsets = [0, 256], sizes = [8, 256], strides = [1, 1]} : vector<8x512xf32> to vector<8x256xf32>
    %125 = arith.addf %123, %124 : vector<8x256xf32>
    %126 = arith.addf %125, %21 : vector<8x256xf32>
    %127 = arith.mulf %126, %15 : vector<8x256xf32>
    %128 = math.tanh %127 : vector<8x256xf32>
    %129 = arith.mulf %128, %15 : vector<8x256xf32>
    %130 = arith.addf %129, %18 : vector<8x256xf32>
    %131 = vector.extract_strided_slice %130 {offsets = [0, 0], sizes = [8, 64], strides = [1, 1]} : vector<8x256xf32> to vector<8x64xf32>
    %132 = vector.extract_strided_slice %130 {offsets = [0, 64], sizes = [8, 64], strides = [1, 1]} : vector<8x256xf32> to vector<8x64xf32>
    %133 = vector.extract_strided_slice %130 {offsets = [0, 128], sizes = [8, 64], strides = [1, 1]} : vector<8x256xf32> to vector<8x64xf32>
    %134 = vector.extract_strided_slice %130 {offsets = [0, 192], sizes = [8, 64], strides = [1, 1]} : vector<8x256xf32> to vector<8x64xf32>
    %135 = arith.mulf %132, %98 : vector<8x64xf32>
    %136 = arith.mulf %131, %133 : vector<8x64xf32>
    %137 = arith.addf %135, %136 : vector<8x64xf32>
    %138 = math.tanh %137 : vector<8x64xf32>
    %139 = arith.mulf %134, %138 : vector<8x64xf32>
    %140 = tpu.concatenate %120, %139 in 1 : vector<8x64xf32>, vector<8x64xf32> -> vector<8x128xf32>
    %141 = arith.truncf %140 : vector<8x128xf32> to vector<8x128xbf16>
    %c0_37 = arith.constant 0 : index
    %c0_38 = arith.constant 0 : index
    %142 = vector.load %arg3[%c0_37, %c0_38] : memref<128x512xbf16, #tpu.memory_space<vmem>>, vector<128x512xbf16>
    %cst_39 = arith.constant dense<0.000000e+00> : vector<8x512xf32>
    %143 = tpu.matmul %141, %142, %cst_39 {dimension_numbers = #tpu.dot_dimension_numbers<[1], [0], [0], [1], [0, 0, 1, 1], [], []>} : vector<8x128xbf16>, vector<128x512xbf16>, vector<8x512xf32> -> vector<8x512xf32>
    %c24 = arith.constant 24 : index
    %c0_40 = arith.constant 0 : index
    %144 = vector.load %arg9[%c24, %c0_40] : memref<64x256xf32, #tpu.memory_space<vmem>>, vector<8x256xf32>
    %145 = vector.extract_strided_slice %143 {offsets = [0, 0], sizes = [8, 256], strides = [1, 1]} : vector<8x512xf32> to vector<8x256xf32>
    %146 = arith.addf %144, %145 : vector<8x256xf32>
    %147 = arith.mulf %146, %15 : vector<8x256xf32>
    %148 = math.tanh %147 : vector<8x256xf32>
    %149 = arith.mulf %148, %15 : vector<8x256xf32>
    %150 = arith.addf %149, %18 : vector<8x256xf32>
    %151 = vector.extract_strided_slice %150 {offsets = [0, 0], sizes = [8, 64], strides = [1, 1]} : vector<8x256xf32> to vector<8x64xf32>
    %152 = vector.extract_strided_slice %150 {offsets = [0, 64], sizes = [8, 64], strides = [1, 1]} : vector<8x256xf32> to vector<8x64xf32>
    %153 = vector.extract_strided_slice %150 {offsets = [0, 128], sizes = [8, 64], strides = [1, 1]} : vector<8x256xf32> to vector<8x64xf32>
    %154 = vector.extract_strided_slice %150 {offsets = [0, 192], sizes = [8, 64], strides = [1, 1]} : vector<8x256xf32> to vector<8x64xf32>
    %155 = arith.mulf %152, %118 : vector<8x64xf32>
    %156 = arith.mulf %151, %153 : vector<8x64xf32>
    %157 = arith.addf %155, %156 : vector<8x64xf32>
    %158 = math.tanh %157 : vector<8x64xf32>
    %159 = arith.mulf %154, %158 : vector<8x64xf32>
    %160 = arith.truncf %159 : vector<8x64xf32> to vector<8x64xbf16>
    %c0_41 = arith.constant 0 : index
    %c0_42 = arith.constant 0 : index
    %161 = vector.load %arg4[%c0_41, %c0_42] : memref<64x256xbf16, #tpu.memory_space<vmem>>, vector<64x256xbf16>
    %cst_43 = arith.constant dense<0.000000e+00> : vector<8x256xf32>
    %162 = tpu.matmul %160, %161, %cst_43 {dimension_numbers = #tpu.dot_dimension_numbers<[1], [0], [0], [1], [0, 0, 1, 1], [], []>} : vector<8x64xbf16>, vector<64x256xbf16>, vector<8x256xf32> -> vector<8x256xf32>
    %163 = vector.extract_strided_slice %143 {offsets = [0, 256], sizes = [8, 256], strides = [1, 1]} : vector<8x512xf32> to vector<8x256xf32>
    %164 = arith.addf %162, %163 : vector<8x256xf32>
    %165 = arith.addf %164, %21 : vector<8x256xf32>
    %166 = arith.mulf %165, %15 : vector<8x256xf32>
    %167 = math.tanh %166 : vector<8x256xf32>
    %168 = arith.mulf %167, %15 : vector<8x256xf32>
    %169 = arith.addf %168, %18 : vector<8x256xf32>
    %170 = vector.extract_strided_slice %169 {offsets = [0, 0], sizes = [8, 64], strides = [1, 1]} : vector<8x256xf32> to vector<8x64xf32>
    %171 = vector.extract_strided_slice %169 {offsets = [0, 64], sizes = [8, 64], strides = [1, 1]} : vector<8x256xf32> to vector<8x64xf32>
    %172 = vector.extract_strided_slice %169 {offsets = [0, 128], sizes = [8, 64], strides = [1, 1]} : vector<8x256xf32> to vector<8x64xf32>
    %173 = vector.extract_strided_slice %169 {offsets = [0, 192], sizes = [8, 64], strides = [1, 1]} : vector<8x256xf32> to vector<8x64xf32>
    %174 = arith.mulf %171, %137 : vector<8x64xf32>
    %175 = arith.mulf %170, %172 : vector<8x64xf32>
    %176 = arith.addf %174, %175 : vector<8x64xf32>
    %177 = math.tanh %176 : vector<8x64xf32>
    %178 = arith.mulf %173, %177 : vector<8x64xf32>
    %179 = tpu.concatenate %159, %178 in 1 : vector<8x64xf32>, vector<8x64xf32> -> vector<8x128xf32>
    %180 = arith.truncf %179 : vector<8x128xf32> to vector<8x128xbf16>
    %c0_44 = arith.constant 0 : index
    %c0_45 = arith.constant 0 : index
    %181 = vector.load %arg3[%c0_44, %c0_45] : memref<128x512xbf16, #tpu.memory_space<vmem>>, vector<128x512xbf16>
    %cst_46 = arith.constant dense<0.000000e+00> : vector<8x512xf32>
    %182 = tpu.matmul %180, %181, %cst_46 {dimension_numbers = #tpu.dot_dimension_numbers<[1], [0], [0], [1], [0, 0, 1, 1], [], []>} : vector<8x128xbf16>, vector<128x512xbf16>, vector<8x512xf32> -> vector<8x512xf32>
    %c32 = arith.constant 32 : index
    %c0_47 = arith.constant 0 : index
    %183 = vector.load %arg9[%c32, %c0_47] : memref<64x256xf32, #tpu.memory_space<vmem>>, vector<8x256xf32>
    %184 = vector.extract_strided_slice %182 {offsets = [0, 0], sizes = [8, 256], strides = [1, 1]} : vector<8x512xf32> to vector<8x256xf32>
    %185 = arith.addf %183, %184 : vector<8x256xf32>
    %186 = arith.mulf %185, %15 : vector<8x256xf32>
    %187 = math.tanh %186 : vector<8x256xf32>
    %188 = arith.mulf %187, %15 : vector<8x256xf32>
    %189 = arith.addf %188, %18 : vector<8x256xf32>
    %190 = vector.extract_strided_slice %189 {offsets = [0, 0], sizes = [8, 64], strides = [1, 1]} : vector<8x256xf32> to vector<8x64xf32>
    %191 = vector.extract_strided_slice %189 {offsets = [0, 64], sizes = [8, 64], strides = [1, 1]} : vector<8x256xf32> to vector<8x64xf32>
    %192 = vector.extract_strided_slice %189 {offsets = [0, 128], sizes = [8, 64], strides = [1, 1]} : vector<8x256xf32> to vector<8x64xf32>
    %193 = vector.extract_strided_slice %189 {offsets = [0, 192], sizes = [8, 64], strides = [1, 1]} : vector<8x256xf32> to vector<8x64xf32>
    %194 = arith.mulf %191, %157 : vector<8x64xf32>
    %195 = arith.mulf %190, %192 : vector<8x64xf32>
    %196 = arith.addf %194, %195 : vector<8x64xf32>
    %197 = math.tanh %196 : vector<8x64xf32>
    %198 = arith.mulf %193, %197 : vector<8x64xf32>
    %199 = arith.truncf %198 : vector<8x64xf32> to vector<8x64xbf16>
    %c0_48 = arith.constant 0 : index
    %c0_49 = arith.constant 0 : index
    %200 = vector.load %arg4[%c0_48, %c0_49] : memref<64x256xbf16, #tpu.memory_space<vmem>>, vector<64x256xbf16>
    %cst_50 = arith.constant dense<0.000000e+00> : vector<8x256xf32>
    %201 = tpu.matmul %199, %200, %cst_50 {dimension_numbers = #tpu.dot_dimension_numbers<[1], [0], [0], [1], [0, 0, 1, 1], [], []>} : vector<8x64xbf16>, vector<64x256xbf16>, vector<8x256xf32> -> vector<8x256xf32>
    %202 = vector.extract_strided_slice %182 {offsets = [0, 256], sizes = [8, 256], strides = [1, 1]} : vector<8x512xf32> to vector<8x256xf32>
    %203 = arith.addf %201, %202 : vector<8x256xf32>
    %204 = arith.addf %203, %21 : vector<8x256xf32>
    %205 = arith.mulf %204, %15 : vector<8x256xf32>
    %206 = math.tanh %205 : vector<8x256xf32>
    %207 = arith.mulf %206, %15 : vector<8x256xf32>
    %208 = arith.addf %207, %18 : vector<8x256xf32>
    %209 = vector.extract_strided_slice %208 {offsets = [0, 0], sizes = [8, 64], strides = [1, 1]} : vector<8x256xf32> to vector<8x64xf32>
    %210 = vector.extract_strided_slice %208 {offsets = [0, 64], sizes = [8, 64], strides = [1, 1]} : vector<8x256xf32> to vector<8x64xf32>
    %211 = vector.extract_strided_slice %208 {offsets = [0, 128], sizes = [8, 64], strides = [1, 1]} : vector<8x256xf32> to vector<8x64xf32>
    %212 = vector.extract_strided_slice %208 {offsets = [0, 192], sizes = [8, 64], strides = [1, 1]} : vector<8x256xf32> to vector<8x64xf32>
    %213 = arith.mulf %210, %176 : vector<8x64xf32>
    %214 = arith.mulf %209, %211 : vector<8x64xf32>
    %215 = arith.addf %213, %214 : vector<8x64xf32>
    %216 = math.tanh %215 : vector<8x64xf32>
    %217 = arith.mulf %212, %216 : vector<8x64xf32>
    %218 = tpu.concatenate %198, %217 in 1 : vector<8x64xf32>, vector<8x64xf32> -> vector<8x128xf32>
    %219 = arith.truncf %218 : vector<8x128xf32> to vector<8x128xbf16>
    %c0_51 = arith.constant 0 : index
    %c0_52 = arith.constant 0 : index
    %220 = vector.load %arg3[%c0_51, %c0_52] : memref<128x512xbf16, #tpu.memory_space<vmem>>, vector<128x512xbf16>
    %cst_53 = arith.constant dense<0.000000e+00> : vector<8x512xf32>
    %221 = tpu.matmul %219, %220, %cst_53 {dimension_numbers = #tpu.dot_dimension_numbers<[1], [0], [0], [1], [0, 0, 1, 1], [], []>} : vector<8x128xbf16>, vector<128x512xbf16>, vector<8x512xf32> -> vector<8x512xf32>
    %c40 = arith.constant 40 : index
    %c0_54 = arith.constant 0 : index
    %222 = vector.load %arg9[%c40, %c0_54] : memref<64x256xf32, #tpu.memory_space<vmem>>, vector<8x256xf32>
    %223 = vector.extract_strided_slice %221 {offsets = [0, 0], sizes = [8, 256], strides = [1, 1]} : vector<8x512xf32> to vector<8x256xf32>
    %224 = arith.addf %222, %223 : vector<8x256xf32>
    %225 = arith.mulf %224, %15 : vector<8x256xf32>
    %226 = math.tanh %225 : vector<8x256xf32>
    %227 = arith.mulf %226, %15 : vector<8x256xf32>
    %228 = arith.addf %227, %18 : vector<8x256xf32>
    %229 = vector.extract_strided_slice %228 {offsets = [0, 0], sizes = [8, 64], strides = [1, 1]} : vector<8x256xf32> to vector<8x64xf32>
    %230 = vector.extract_strided_slice %228 {offsets = [0, 64], sizes = [8, 64], strides = [1, 1]} : vector<8x256xf32> to vector<8x64xf32>
    %231 = vector.extract_strided_slice %228 {offsets = [0, 128], sizes = [8, 64], strides = [1, 1]} : vector<8x256xf32> to vector<8x64xf32>
    %232 = vector.extract_strided_slice %228 {offsets = [0, 192], sizes = [8, 64], strides = [1, 1]} : vector<8x256xf32> to vector<8x64xf32>
    %233 = arith.mulf %230, %196 : vector<8x64xf32>
    %234 = arith.mulf %229, %231 : vector<8x64xf32>
    %235 = arith.addf %233, %234 : vector<8x64xf32>
    %236 = math.tanh %235 : vector<8x64xf32>
    %237 = arith.mulf %232, %236 : vector<8x64xf32>
    %238 = arith.truncf %237 : vector<8x64xf32> to vector<8x64xbf16>
    %c0_55 = arith.constant 0 : index
    %c0_56 = arith.constant 0 : index
    %239 = vector.load %arg4[%c0_55, %c0_56] : memref<64x256xbf16, #tpu.memory_space<vmem>>, vector<64x256xbf16>
    %cst_57 = arith.constant dense<0.000000e+00> : vector<8x256xf32>
    %240 = tpu.matmul %238, %239, %cst_57 {dimension_numbers = #tpu.dot_dimension_numbers<[1], [0], [0], [1], [0, 0, 1, 1], [], []>} : vector<8x64xbf16>, vector<64x256xbf16>, vector<8x256xf32> -> vector<8x256xf32>
    %241 = vector.extract_strided_slice %221 {offsets = [0, 256], sizes = [8, 256], strides = [1, 1]} : vector<8x512xf32> to vector<8x256xf32>
    %242 = arith.addf %240, %241 : vector<8x256xf32>
    %243 = arith.addf %242, %21 : vector<8x256xf32>
    %244 = arith.mulf %243, %15 : vector<8x256xf32>
    %245 = math.tanh %244 : vector<8x256xf32>
    %246 = arith.mulf %245, %15 : vector<8x256xf32>
    %247 = arith.addf %246, %18 : vector<8x256xf32>
    %248 = vector.extract_strided_slice %247 {offsets = [0, 0], sizes = [8, 64], strides = [1, 1]} : vector<8x256xf32> to vector<8x64xf32>
    %249 = vector.extract_strided_slice %247 {offsets = [0, 64], sizes = [8, 64], strides = [1, 1]} : vector<8x256xf32> to vector<8x64xf32>
    %250 = vector.extract_strided_slice %247 {offsets = [0, 128], sizes = [8, 64], strides = [1, 1]} : vector<8x256xf32> to vector<8x64xf32>
    %251 = vector.extract_strided_slice %247 {offsets = [0, 192], sizes = [8, 64], strides = [1, 1]} : vector<8x256xf32> to vector<8x64xf32>
    %252 = arith.mulf %249, %215 : vector<8x64xf32>
    %253 = arith.mulf %248, %250 : vector<8x64xf32>
    %254 = arith.addf %252, %253 : vector<8x64xf32>
    %255 = math.tanh %254 : vector<8x64xf32>
    %256 = arith.mulf %251, %255 : vector<8x64xf32>
    %257 = tpu.concatenate %237, %256 in 1 : vector<8x64xf32>, vector<8x64xf32> -> vector<8x128xf32>
    %258 = arith.truncf %257 : vector<8x128xf32> to vector<8x128xbf16>
    %c0_58 = arith.constant 0 : index
    %c0_59 = arith.constant 0 : index
    %259 = vector.load %arg3[%c0_58, %c0_59] : memref<128x512xbf16, #tpu.memory_space<vmem>>, vector<128x512xbf16>
    %cst_60 = arith.constant dense<0.000000e+00> : vector<8x512xf32>
    %260 = tpu.matmul %258, %259, %cst_60 {dimension_numbers = #tpu.dot_dimension_numbers<[1], [0], [0], [1], [0, 0, 1, 1], [], []>} : vector<8x128xbf16>, vector<128x512xbf16>, vector<8x512xf32> -> vector<8x512xf32>
    %c48 = arith.constant 48 : index
    %c0_61 = arith.constant 0 : index
    %261 = vector.load %arg9[%c48, %c0_61] : memref<64x256xf32, #tpu.memory_space<vmem>>, vector<8x256xf32>
    %262 = vector.extract_strided_slice %260 {offsets = [0, 0], sizes = [8, 256], strides = [1, 1]} : vector<8x512xf32> to vector<8x256xf32>
    %263 = arith.addf %261, %262 : vector<8x256xf32>
    %264 = arith.mulf %263, %15 : vector<8x256xf32>
    %265 = math.tanh %264 : vector<8x256xf32>
    %266 = arith.mulf %265, %15 : vector<8x256xf32>
    %267 = arith.addf %266, %18 : vector<8x256xf32>
    %268 = vector.extract_strided_slice %267 {offsets = [0, 0], sizes = [8, 64], strides = [1, 1]} : vector<8x256xf32> to vector<8x64xf32>
    %269 = vector.extract_strided_slice %267 {offsets = [0, 64], sizes = [8, 64], strides = [1, 1]} : vector<8x256xf32> to vector<8x64xf32>
    %270 = vector.extract_strided_slice %267 {offsets = [0, 128], sizes = [8, 64], strides = [1, 1]} : vector<8x256xf32> to vector<8x64xf32>
    %271 = vector.extract_strided_slice %267 {offsets = [0, 192], sizes = [8, 64], strides = [1, 1]} : vector<8x256xf32> to vector<8x64xf32>
    %272 = arith.mulf %269, %235 : vector<8x64xf32>
    %273 = arith.mulf %268, %270 : vector<8x64xf32>
    %274 = arith.addf %272, %273 : vector<8x64xf32>
    %275 = math.tanh %274 : vector<8x64xf32>
    %276 = arith.mulf %271, %275 : vector<8x64xf32>
    %277 = arith.truncf %276 : vector<8x64xf32> to vector<8x64xbf16>
    %c0_62 = arith.constant 0 : index
    %c0_63 = arith.constant 0 : index
    %278 = vector.load %arg4[%c0_62, %c0_63] : memref<64x256xbf16, #tpu.memory_space<vmem>>, vector<64x256xbf16>
    %cst_64 = arith.constant dense<0.000000e+00> : vector<8x256xf32>
    %279 = tpu.matmul %277, %278, %cst_64 {dimension_numbers = #tpu.dot_dimension_numbers<[1], [0], [0], [1], [0, 0, 1, 1], [], []>} : vector<8x64xbf16>, vector<64x256xbf16>, vector<8x256xf32> -> vector<8x256xf32>
    %280 = vector.extract_strided_slice %260 {offsets = [0, 256], sizes = [8, 256], strides = [1, 1]} : vector<8x512xf32> to vector<8x256xf32>
    %281 = arith.addf %279, %280 : vector<8x256xf32>
    %282 = arith.addf %281, %21 : vector<8x256xf32>
    %283 = arith.mulf %282, %15 : vector<8x256xf32>
    %284 = math.tanh %283 : vector<8x256xf32>
    %285 = arith.mulf %284, %15 : vector<8x256xf32>
    %286 = arith.addf %285, %18 : vector<8x256xf32>
    %287 = vector.extract_strided_slice %286 {offsets = [0, 0], sizes = [8, 64], strides = [1, 1]} : vector<8x256xf32> to vector<8x64xf32>
    %288 = vector.extract_strided_slice %286 {offsets = [0, 64], sizes = [8, 64], strides = [1, 1]} : vector<8x256xf32> to vector<8x64xf32>
    %289 = vector.extract_strided_slice %286 {offsets = [0, 128], sizes = [8, 64], strides = [1, 1]} : vector<8x256xf32> to vector<8x64xf32>
    %290 = vector.extract_strided_slice %286 {offsets = [0, 192], sizes = [8, 64], strides = [1, 1]} : vector<8x256xf32> to vector<8x64xf32>
    %291 = arith.mulf %288, %254 : vector<8x64xf32>
    %292 = arith.mulf %287, %289 : vector<8x64xf32>
    %293 = arith.addf %291, %292 : vector<8x64xf32>
    %294 = math.tanh %293 : vector<8x64xf32>
    %295 = arith.mulf %290, %294 : vector<8x64xf32>
    %296 = tpu.concatenate %276, %295 in 1 : vector<8x64xf32>, vector<8x64xf32> -> vector<8x128xf32>
    %297 = arith.truncf %296 : vector<8x128xf32> to vector<8x128xbf16>
    %c0_65 = arith.constant 0 : index
    %c0_66 = arith.constant 0 : index
    %298 = vector.load %arg3[%c0_65, %c0_66] : memref<128x512xbf16, #tpu.memory_space<vmem>>, vector<128x512xbf16>
    %cst_67 = arith.constant dense<0.000000e+00> : vector<8x512xf32>
    %299 = tpu.matmul %297, %298, %cst_67 {dimension_numbers = #tpu.dot_dimension_numbers<[1], [0], [0], [1], [0, 0, 1, 1], [], []>} : vector<8x128xbf16>, vector<128x512xbf16>, vector<8x512xf32> -> vector<8x512xf32>
    %c56 = arith.constant 56 : index
    %c0_68 = arith.constant 0 : index
    %300 = vector.load %arg9[%c56, %c0_68] : memref<64x256xf32, #tpu.memory_space<vmem>>, vector<8x256xf32>
    %301 = vector.extract_strided_slice %299 {offsets = [0, 0], sizes = [8, 256], strides = [1, 1]} : vector<8x512xf32> to vector<8x256xf32>
    %302 = arith.addf %300, %301 : vector<8x256xf32>
    %303 = arith.mulf %302, %15 : vector<8x256xf32>
    %304 = math.tanh %303 : vector<8x256xf32>
    %305 = arith.mulf %304, %15 : vector<8x256xf32>
    %306 = arith.addf %305, %18 : vector<8x256xf32>
    %307 = vector.extract_strided_slice %306 {offsets = [0, 0], sizes = [8, 64], strides = [1, 1]} : vector<8x256xf32> to vector<8x64xf32>
    %308 = vector.extract_strided_slice %306 {offsets = [0, 64], sizes = [8, 64], strides = [1, 1]} : vector<8x256xf32> to vector<8x64xf32>
    %309 = vector.extract_strided_slice %306 {offsets = [0, 128], sizes = [8, 64], strides = [1, 1]} : vector<8x256xf32> to vector<8x64xf32>
    %310 = vector.extract_strided_slice %306 {offsets = [0, 192], sizes = [8, 64], strides = [1, 1]} : vector<8x256xf32> to vector<8x64xf32>
    %311 = arith.mulf %308, %274 : vector<8x64xf32>
    %312 = arith.mulf %307, %309 : vector<8x64xf32>
    %313 = arith.addf %311, %312 : vector<8x64xf32>
    %314 = math.tanh %313 : vector<8x64xf32>
    %315 = arith.mulf %310, %314 : vector<8x64xf32>
    %316 = arith.truncf %315 : vector<8x64xf32> to vector<8x64xbf16>
    %c0_69 = arith.constant 0 : index
    %c0_70 = arith.constant 0 : index
    %317 = vector.load %arg4[%c0_69, %c0_70] : memref<64x256xbf16, #tpu.memory_space<vmem>>, vector<64x256xbf16>
    %cst_71 = arith.constant dense<0.000000e+00> : vector<8x256xf32>
    %318 = tpu.matmul %316, %317, %cst_71 {dimension_numbers = #tpu.dot_dimension_numbers<[1], [0], [0], [1], [0, 0, 1, 1], [], []>} : vector<8x64xbf16>, vector<64x256xbf16>, vector<8x256xf32> -> vector<8x256xf32>
    %319 = vector.extract_strided_slice %299 {offsets = [0, 256], sizes = [8, 256], strides = [1, 1]} : vector<8x512xf32> to vector<8x256xf32>
    %320 = arith.addf %318, %319 : vector<8x256xf32>
    %321 = arith.addf %320, %21 : vector<8x256xf32>
    %322 = arith.mulf %321, %15 : vector<8x256xf32>
    %323 = math.tanh %322 : vector<8x256xf32>
    %324 = arith.mulf %323, %15 : vector<8x256xf32>
    %325 = arith.addf %324, %18 : vector<8x256xf32>
    %326 = vector.extract_strided_slice %325 {offsets = [0, 0], sizes = [8, 64], strides = [1, 1]} : vector<8x256xf32> to vector<8x64xf32>
    %327 = vector.extract_strided_slice %325 {offsets = [0, 64], sizes = [8, 64], strides = [1, 1]} : vector<8x256xf32> to vector<8x64xf32>
    %328 = vector.extract_strided_slice %325 {offsets = [0, 128], sizes = [8, 64], strides = [1, 1]} : vector<8x256xf32> to vector<8x64xf32>
    %329 = vector.extract_strided_slice %325 {offsets = [0, 192], sizes = [8, 64], strides = [1, 1]} : vector<8x256xf32> to vector<8x64xf32>
    %330 = arith.mulf %327, %293 : vector<8x64xf32>
    %331 = arith.mulf %326, %328 : vector<8x64xf32>
    %332 = arith.addf %330, %331 : vector<8x64xf32>
    %333 = math.tanh %332 : vector<8x64xf32>
    %334 = arith.mulf %329, %333 : vector<8x64xf32>
    %335 = arith.truncf %334 : vector<8x64xf32> to vector<8x64xbf16>
    %c0_72 = arith.constant 0 : index
    %c0_73 = arith.constant 0 : index
    %336 = vector.load %arg6[%c0_72, %c0_73] : memref<64x128xbf16, #tpu.memory_space<vmem>>, vector<64x128xbf16>
    %cst_74 = arith.constant dense<0.000000e+00> : vector<8x128xf32>
    %337 = tpu.matmul %335, %336, %cst_74 {dimension_numbers = #tpu.dot_dimension_numbers<[1], [0], [0], [1], [0, 0, 1, 1], [], []>} : vector<8x64xbf16>, vector<64x128xbf16>, vector<8x128xf32> -> vector<8x128xf32>
    %c0_75 = arith.constant 0 : index
    %c0_76 = arith.constant 0 : index
    %338 = vector.load %arg7[%c0_75, %c0_76] : memref<1x128xf32, #tpu.memory_space<vmem>>, vector<1x128xf32>
    %339 = vector.broadcast %338 : vector<1x128xf32> to vector<8x128xf32>
    %340 = arith.addf %337, %339 : vector<8x128xf32>
    %c0_77 = arith.constant 0 : index
    %c0_78 = arith.constant 0 : index
    %341 = vector.load %arg8[%c0_77, %c0_78] : memref<8x128xf32, #tpu.memory_space<vmem>>, vector<8x128xf32>
    tpu.vector_store %arg8[%c0_77, %c0_78], %340 {strides = array<i32>} : memref<8x128xf32, #tpu.memory_space<vmem>>, vector<8x128xf32>,
    return
  }
}

</mosaic_0001>

<llo_original>
// kernel: lstm_predictor_forward.1
$region0: #{lstm_predictor_forward.1}
  #allocation0 [shape = 'u32[]', space=smem, size = 0x4, offset = 0x4, fixed_abs, tag = 'smem constant byte address 0x4 - core index']
  #allocation1 [shape = 'u32[144,128]{1,0:T(1,128)}', space=vmem, size = 0x12000, scoped, tag = 'internal scratch']
  #allocation2 [shape = 'f32[64,256]{1,0:T(8,128)}', space=vmem, size = 0x10000, scoped, tag = 'scratch operand']
  %s0 = inlined_call_operand.vmem [shape: bf16[64,8], index: 0, kind: input, shape index: {}]
  %s1 = inlined_call_operand.vmem [shape: bf16[8,256], index: 1, kind: input, shape index: {}]
  %s2 = inlined_call_operand.vmem [shape: f32[1,256], index: 2, kind: input, shape index: {}]
  %s3 = inlined_call_operand.hbm [shape: bf16[128,512], index: 3, kind: input, shape index: {}]
  %s4 = inlined_call_operand.vmem [shape: bf16[64,256], index: 4, kind: input, shape index: {}]
  %s5 = inlined_call_operand.vmem [shape: f32[1,256], index: 5, kind: input, shape index: {}]
  %s6 = inlined_call_operand.hbm [shape: bf16[64,128], index: 6, kind: input, shape index: {}]
  %s7 = inlined_call_operand.vmem [shape: f32[1,128], index: 7, kind: input, shape index: {}]
  %s8 = inlined_call_operand.vmem [shape: f32[8,128], index: 8, kind: output, shape index: {}]
  %s9 = sld [smem:[#allocation0]]
  $region50: #{lstm_predictor_forward.1} parent=0
    _
  %s11 = ssub.s32 1, %s9
  %s12 = scalar_select 0, %s11, %s9
  $region1: #{lstm_predictor_forward.1} parent=0
    #allocation3 [shape = 'u8[131072]{0}', space=vmem, size = 0x20000, scoped, tag = 'input window, operand 3, single buffered']
    #allocation4 [shape = 's32[1]{0}', space=sflag, size = 0x4, scoped, tag = 'scoped memory for lstm_predictor_forward.1']
    #allocation5 [shape = 'u8[16384]{0}', space=vmem, size = 0x4000, scoped, tag = 'input window, operand 6, single buffered']
    #allocation6 [shape = 's32[1]{0}', space=sflag, size = 0x4, scoped, tag = 'scoped memory for lstm_predictor_forward.1']
    %13 = vsyncpa [#allocation4], 0
    %14 = vsyncpa [#allocation6], 0
    // Predicated region
    $region2: #{lstm_predictor_forward.1} parent=1 // pred_check
      _
    $region3: #{lstm_predictor_forward.1} parent=1 // pred_check_branch
      %16 = sbr.rel (0) target = $region5
    $region4: #{lstm_predictor_forward.1} parent=1 // pred_region
      _
    $region5: #{lstm_predictor_forward.1} parent=1 // pred_fallthru
      _
    // Predicated region
    $region6: #{lstm_predictor_forward.1} parent=1 // pred_check
      _
    $region7: #{lstm_predictor_forward.1} parent=1 // pred_check_branch
      %18 = sbr.rel (0) target = $region9
    $region8: #{lstm_predictor_forward.1} parent=1 // pred_region
      _
    $region9: #{lstm_predictor_forward.1} parent=1 // pred_fallthru
      _
    // Predicated region
    $region10: #{lstm_predictor_forward.1} parent=1 // pred_check
      _
    $region11: #{lstm_predictor_forward.1} parent=1 // pred_check_branch
      %20 = sbr.rel (0) target = $region13
    $region12: #{lstm_predictor_forward.1} parent=1 // pred_region
      _
    $region13: #{lstm_predictor_forward.1} parent=1 // pred_fallthru
      _
    // Predicated region
    $region14: #{lstm_predictor_forward.1} parent=1 // pred_check
      _
    $region15: #{lstm_predictor_forward.1} parent=1 // pred_check_branch
      %22 = sbr.rel (0) target = $region17
    $region16: #{lstm_predictor_forward.1} parent=1 // pred_region
      %s24 = ssub.s32 4096, 4096
      %25 = vsyncadd [#allocation4], %s24
      %s26 = sshll.u32 [#allocation3], 4
      %s27 = int_to_ptr.vmem [resolvable:$true] %s26
      %32 = dma.hbm_to_vmem [thread:$0]  %s3, 4096, %s27, [#allocation4], 256, 256, 16
    $region17: #{lstm_predictor_forward.1} parent=1 // pred_fallthru
      _
    // Predicated region
    $region18: #{lstm_predictor_forward.1} parent=1 // pred_check
      _
    $region19: #{lstm_predictor_forward.1} parent=1 // pred_check_branch
      %34 = sbr.rel (0) target = $region21
    $region20: #{lstm_predictor_forward.1} parent=1 // pred_region
      _
    $region21: #{lstm_predictor_forward.1} parent=1 // pred_fallthru
      _
    // Predicated region
    $region22: #{lstm_predictor_forward.1} parent=1 // pred_check
      _
    $region23: #{lstm_predictor_forward.1} parent=1 // pred_check_branch
      %36 = sbr.rel (0) target = $region25
    $region24: #{lstm_predictor_forward.1} parent=1 // pred_region
      _
    $region25: #{lstm_predictor_forward.1} parent=1 // pred_fallthru
      _
    // Predicated region
    $region26: #{lstm_predictor_forward.1} parent=1 // pred_check
      _
    $region27: #{lstm_predictor_forward.1} parent=1 // pred_check_branch
      %38 = sbr.rel (0) target = $region29
    $region28: #{lstm_predictor_forward.1} parent=1 // pred_region
      %s40 = ssub.s32 512, 512
      %41 = vsyncadd [#allocation6], %s40
      %s42 = sshll.u32 [#allocation5], 4
      %s43 = int_to_ptr.vmem [resolvable:$true] %s42
      %48 = dma.hbm_to_vmem [thread:$0]  %s6, 512, %s43, [#allocation6], 64, 64, 4
    $region29: #{lstm_predictor_forward.1} parent=1 // pred_fallthru
      _
    // Predicated region
    $region30: #{lstm_predictor_forward.1} parent=1 // pred_check
      _
    $region31: #{lstm_predictor_forward.1} parent=1 // pred_check_branch
      %50 = sbr.rel (0) target = $region33
    $region32: #{lstm_predictor_forward.1} parent=1 // pred_region
      _
    $region33: #{lstm_predictor_forward.1} parent=1 // pred_fallthru
      _
    // Predicated region
    $region34: #{lstm_predictor_forward.1} parent=1 // pred_check
      _
    $region35: #{lstm_predictor_forward.1} parent=1 // pred_check_branch
      %52 = sbr.rel (0) target = $region37
    $region36: #{lstm_predictor_forward.1} parent=1 // pred_region
      %53 = dma.done [#allocation4], 4096
    $region37: #{lstm_predictor_forward.1} parent=1 // pred_fallthru
      _
    // Predicated region
    $region38: #{lstm_predictor_forward.1} parent=1 // pred_check
      _
    $region39: #{lstm_predictor_forward.1} parent=1 // pred_check_branch
      %55 = sbr.rel (0) target = $region41
    $region40: #{lstm_predictor_forward.1} parent=1 // pred_region
      %56 = dma.done [#allocation6], 512
    $region41: #{lstm_predictor_forward.1} parent=1 // pred_fallthru
      _
    %v58 = vld [vmem:[%s0] sm:$0xf]
    %v59 = vld [vmem:[%s0 + $0x4] sm:$0xf]
    %v60 = vld [vmem:[%s0 + $0x8] sm:$0xf]
    %v61 = vld [vmem:[%s0 + $0xc] sm:$0xf]
    %v62 = vld [vmem:[%s0 + $0x10] sm:$0xf]
    %v63 = vld [vmem:[%s0 + $0x14] sm:$0xf]
    %v64 = vld [vmem:[%s0 + $0x18] sm:$0xf]
    %v65 = vld [vmem:[%s0 + $0x1c] sm:$0xf]
    %v66 = vld [vmem:[%s1] sm:$0xff]
    %v67 = vld [vmem:[%s2] sm:$0x3]
    %v69 = vlaneseq
    %v70 = vshrl.u32 %v69, 7
    %v71 = vsub.s32 0, %v70
    %v72 = vrot.slane %v67, %v71
    %v73 = vlaneseq
    %v74 = vshrl.u32 %v73, 7
    %v75 = vsub.s32 1, %v74
    %v76 = vrot.slane %v67, %v75
    %v87 = vunpack.c.l.b16 %v58
    %v88 = vunpack.c.l.b16 %v59
    %v89 = vunpack.c.l.b16 %v60
    %v90 = vunpack.c.l.b16 %v61
    %v91 = vunpack.c.l.b16 %v62
    %v92 = vunpack.c.l.b16 %v63
    %v93 = vunpack.c.l.b16 %v64
    %v94 = vunpack.c.l.b16 %v65
    %v95 = vpack.c.b16 %v88, %v87
    %v96 = vpack.c.b16 %v90, %v89
    %v97 = vpack.c.b16 %v92, %v91
    %v98 = vpack.c.b16 %v94, %v93
    %v100 = vunpack.c.l.b16 %v66
    %v101 = vunpack.c.h.b16 %v66
    %v102 = vpack.c.b16 %v100, %v100
    %v103 = vpack.c.b16 %v101, %v101
    %vm104 = vcmask 64512
    %v106 = vsel %vm104, %v95, 0
    %v109 = vsel %vm104, %v96, 0
    %v112 = vsel %vm104, %v97, 0
    %v115 = vsel %vm104, %v98, 0
    %vm117 = vcmask 1043456
    %v119 = vsel %vm117, %v102, 0
    %v122 = vsel %vm117, %v103, 0
    %124 = vmatprep.subr.bf16.mxu0 %v122
    %125 = vmatpush1.bf16.msra.mxu0 %v119
    %126 = vmatprep.subr.bf16.mxu0 0
    %127 = vmatpush1.bf16.msra.mxu0 0
    %128 = vmatprep.subr.bf16.mxu0 0
    %129 = vmatpush1.bf16.msra.mxu0 0
    %130 = vmatprep.subr.bf16.mxu0 0
    %131 = vmatpush1.bf16.msra.mxu0 0
    %132 = vmatprep.subr.bf16.mxu0 0
    %133 = vmatpush1.bf16.msra.mxu0 0
    %134 = vmatprep.subr.bf16.mxu0 0
    %135 = vmatpush1.bf16.msra.mxu0 0
    %136 = vmatprep.subr.bf16.mxu0 0
    %137 = vmatpush1.bf16.msra.mxu0 0
    %138 = vmatprep.subr.bf16.mxu0 0
    %139 = vmatpush1.bf16.msra.mxu0 0
    %140 = vmatprep.subr.bf16.mxu0 0
    %141 = vmatpush1.bf16.msra.mxu0 0
    %142 = vmatprep.subr.bf16.mxu0 0
    %143 = vmatpush1.bf16.msra.mxu0 0
    %144 = vmatprep.subr.bf16.mxu0 0
    %145 = vmatpush1.bf16.msra.mxu0 0
    %146 = vmatprep.subr.bf16.mxu0 0
    %147 = vmatpush1.bf16.msra.mxu0 0
    %148 = vmatprep.subr.bf16.mxu0 0
    %149 = vmatpush1.bf16.msra.mxu0 0
    %150 = vmatprep.subr.bf16.mxu0 0
    %151 = vmatpush1.bf16.msra.mxu0 0
    %152 = vmatprep.subr.bf16.mxu0 0
    %153 = vmatpush1.bf16.msra.mxu0 0
    %154 = vmatprep.subr.bf16.mxu0 0
    %155 = vmatpush1.bf16.msra.mxu0 0
    %156 = vmatprep.mubr.bf16.mxu0 0
    %157 = vmatmul.mubr.bf16.gmra.mrb[0].mxu0 %v106
    %v158 = vpop.f32.mrb[0].mxu0
    %v159 = vadd.f32 %v72, %v158
    %v160 = vpop.f32.mrb[0].mxu0
    %v161 = vadd.f32 %v76, %v160
    %v162 = vpop.f32.mrb[0].mxu0
    %v163 = vadd.f32 %v72, %v162
    %v164 = vpop.f32.mrb[0].mxu0
    %v165 = vadd.f32 %v76, %v164
    %166 = vmatprep.mubr.bf16.mxu0 0
    %167 = vmatmul.mubr.bf16.gmra.mrb[0].mxu0 %v109
    %v168 = vpop.f32.mrb[0].mxu0
    %v169 = vadd.f32 %v72, %v168
    %v170 = vpop.f32.mrb[0].mxu0
    %v171 = vadd.f32 %v76, %v170
    %v172 = vpop.f32.mrb[0].mxu0
    %v173 = vadd.f32 %v72, %v172
    %v174 = vpop.f32.mrb[0].mxu0
    %v175 = vadd.f32 %v76, %v174
    %176 = vmatprep.mubr.bf16.mxu0 0
    %177 = vmatmul.mubr.bf16.gmra.mrb[0].mxu0 %v112
    %v178 = vpop.f32.mrb[0].mxu0
    %v179 = vadd.f32 %v72, %v178
    %v180 = vpop.f32.mrb[0].mxu0
    %v181 = vadd.f32 %v76, %v180
    %v182 = vpop.f32.mrb[0].mxu0
    %v183 = vadd.f32 %v72, %v182
    %v184 = vpop.f32.mrb[0].mxu0
    %v185 = vadd.f32 %v76, %v184
    %186 = vmatprep.mubr.bf16.mxu0 0
    %187 = vmatmul.mubr.bf16.gmra.mrb[0].mxu0 %v115
    %v188 = vpop.f32.mrb[0].mxu0
    %v189 = vadd.f32 %v72, %v188
    %v190 = vpop.f32.mrb[0].mxu0
    %v191 = vadd.f32 %v76, %v190
    %v192 = vpop.f32.mrb[0].mxu0
    %v193 = vadd.f32 %v72, %v192
    %v194 = vpop.f32.mrb[0].mxu0
    %v195 = vadd.f32 %v76, %v194
    %196 = vdwg.mxu0
    %197 = vst [vmem:[#allocation2] sm:$0xff] %v159
    %198 = vst [vmem:[#allocation2 + $0x8] sm:$0xff] %v161
    %199 = vst [vmem:[#allocation2 + $0x10] sm:$0xff] %v163
    %200 = vst [vmem:[#allocation2 + $0x18] sm:$0xff] %v165
    %201 = vst [vmem:[#allocation2 + $0x20] sm:$0xff] %v169
    %202 = vst [vmem:[#allocation2 + $0x28] sm:$0xff] %v171
    %203 = vst [vmem:[#allocation2 + $0x30] sm:$0xff] %v173
    %204 = vst [vmem:[#allocation2 + $0x38] sm:$0xff] %v175
    %205 = vst [vmem:[#allocation2 + $0x40] sm:$0xff] %v179
    %206 = vst [vmem:[#allocation2 + $0x48] sm:$0xff] %v181
    %207 = vst [vmem:[#allocation2 + $0x50] sm:$0xff] %v183
    %208 = vst [vmem:[#allocation2 + $0x58] sm:$0xff] %v185
    %209 = vst [vmem:[#allocation2 + $0x60] sm:$0xff] %v189
    %210 = vst [vmem:[#allocation2 + $0x68] sm:$0xff] %v191
    %211 = vst [vmem:[#allocation2 + $0x70] sm:$0xff] %v193
    %212 = vst [vmem:[#allocation2 + $0x78] sm:$0xff] %v195
    %v213 = vlaneseq
    %v214 = vand.u32 %v213, 127
    %v215 = vadd.s32 %v214, 128
    %vm216 = vcmp.ge.s32.totalorder %v214, 128
    %vm217 = vcmp.ge.s32.totalorder %v215, 128
    %vm218 = vcmp.lt.s32.totalorder %v214, 192
    %vm219 = vcmp.lt.s32.totalorder %v215, 192
    %vm220 = vmand %vm216, %vm218
    %vm221 = vmand %vm217, %vm219
    %v222 = vsel %vm220, 1.0, 0.5
    %v223 = vsel %vm221, 1.0, 0.5
    %v224 = vsel %vm220, 0.0, 0.5
    %v225 = vsel %vm221, 0.0, 0.5
    %v226 = vld [vmem:[%s5] sm:$0x3]
    %v228 = vlaneseq
    %v229 = vshrl.u32 %v228, 7
    %v230 = vsub.s32 0, %v229
    %v231 = vrot.slane %v226, %v230
    %v232 = vlaneseq
    %v233 = vshrl.u32 %v232, 7
    %v234 = vsub.s32 1, %v233
    %v235 = vrot.slane %v226, %v234
    %v238 = vld [vmem:[#allocation3] sm:$0xff]
    %v239 = vld [vmem:[#allocation3 + $0x8] sm:$0xff]
    %v240 = vld [vmem:[#allocation3 + $0x10] sm:$0xff]
    %v241 = vld [vmem:[#allocation3 + $0x18] sm:$0xff]
    %v242 = vld [vmem:[#allocation3 + $0x20] sm:$0xff]
    %v243 = vld [vmem:[#allocation3 + $0x28] sm:$0xff]
    %v244 = vld [vmem:[#allocation3 + $0x30] sm:$0xff]
    %v245 = vld [vmem:[#allocation3 + $0x38] sm:$0xff]
    %v246 = vld [vmem:[#allocation3 + $0x40] sm:$0xff]
    %v247 = vld [vmem:[#allocation3 + $0x48] sm:$0xff]
    %v248 = vld [vmem:[#allocation3 + $0x50] sm:$0xff]
    %v249 = vld [vmem:[#allocation3 + $0x58] sm:$0xff]
    %v250 = vld [vmem:[#allocation3 + $0x60] sm:$0xff]
    %v251 = vld [vmem:[#allocation3 + $0x68] sm:$0xff]
    %v252 = vld [vmem:[#allocation3 + $0x70] sm:$0xff]
    %v253 = vld [vmem:[#allocation3 + $0x78] sm:$0xff]
    %v254 = vld [vmem:[#allocation3 + $0x80] sm:$0xff]
    %v255 = vld [vmem:[#allocation3 + $0x88] sm:$0xff]
    %v256 = vld [vmem:[#allocation3 + $0x90] sm:$0xff]
    %v257 = vld [vmem:[#allocation3 + $0x98] sm:$0xff]
    %v258 = vld [vmem:[#allocation3 + $0xa0] sm:$0xff]
    %v259 = vld [vmem:[#allocation3 + $0xa8] sm:$0xff]
    %v260 = vld [vmem:[#allocation3 + $0xb0] sm:$0xff]
    %v261 = vld [vmem:[#allocation3 + $0xb8] sm:$0xff]
    %v262 = vld [vmem:[#allocation3 + $0xc0] sm:$0xff]
    %v263 = vld [vmem:[#allocation3 + $0xc8] sm:$0xff]
    %v264 = vld [vmem:[#allocation3 + $0xd0] sm:$0xff]
    %v265 = vld [vmem:[#allocation3 + $0xd8] sm:$0xff]
    %v266 = vld [vmem:[#allocation3 + $0xe0] sm:$0xff]
    %v267 = vld [vmem:[#allocation3 + $0xe8] sm:$0xff]
    %v268 = vld [vmem:[#allocation3 + $0xf0] sm:$0xff]
    %v269 = vld [vmem:[#allocation3 + $0xf8] sm:$0xff]
    %v302 = vunpack.c.l.b16 %v238
    %v303 = vunpack.c.h.b16 %v238
    %v304 = vunpack.c.l.b16 %v239
    %v305 = vunpack.c.h.b16 %v239
    %v306 = vunpack.c.l.b16 %v240
    %v307 = vunpack.c.h.b16 %v240
    %v308 = vunpack.c.l.b16 %v241
    %v309 = vunpack.c.h.b16 %v241
    %v310 = vunpack.c.l.b16 %v242
    %v311 = vunpack.c.h.b16 %v242
    %v312 = vunpack.c.l.b16 %v243
    %v313 = vunpack.c.h.b16 %v243
    %v314 = vunpack.c.l.b16 %v244
    %v315 = vunpack.c.h.b16 %v244
    %v316 = vunpack.c.l.b16 %v245
    %v317 = vunpack.c.h.b16 %v245
    %v318 = vunpack.c.l.b16 %v246
    %v319 = vunpack.c.h.b16 %v246
    %v320 = vunpack.c.l.b16 %v247
    %v321 = vunpack.c.h.b16 %v247
    %v322 = vunpack.c.l.b16 %v248
    %v323 = vunpack.c.h.b16 %v248
    %v324 = vunpack.c.l.b16 %v249
    %v325 = vunpack.c.h.b16 %v249
    %v326 = vunpack.c.l.b16 %v250
    %v327 = vunpack.c.h.b16 %v250
    %v328 = vunpack.c.l.b16 %v251
    %v329 = vunpack.c.h.b16 %v251
    %v330 = vunpack.c.l.b16 %v252
    %v331 = vunpack.c.h.b16 %v252
    %v332 = vunpack.c.l.b16 %v253
    %v333 = vunpack.c.h.b16 %v253
    %v334 = vunpack.c.l.b16 %v254
    %v335 = vunpack.c.h.b16 %v254
    %v336 = vunpack.c.l.b16 %v255
    %v337 = vunpack.c.h.b16 %v255
    %v338 = vunpack.c.l.b16 %v256
    %v339 = vunpack.c.h.b16 %v256
    %v340 = vunpack.c.l.b16 %v257
    %v341 = vunpack.c.h.b16 %v257
    %v342 = vunpack.c.l.b16 %v258
    %v343 = vunpack.c.h.b16 %v258
    %v344 = vunpack.c.l.b16 %v259
    %v345 = vunpack.c.h.b16 %v259
    %v346 = vunpack.c.l.b16 %v260
    %v347 = vunpack.c.h.b16 %v260
    %v348 = vunpack.c.l.b16 %v261
    %v349 = vunpack.c.h.b16 %v261
    %v350 = vunpack.c.l.b16 %v262
    %v351 = vunpack.c.h.b16 %v262
    %v352 = vunpack.c.l.b16 %v263
    %v353 = vunpack.c.h.b16 %v263
    %v354 = vunpack.c.l.b16 %v264
    %v355 = vunpack.c.h.b16 %v264
    %v356 = vunpack.c.l.b16 %v265
    %v357 = vunpack.c.h.b16 %v265
    %v358 = vunpack.c.l.b16 %v266
    %v359 = vunpack.c.h.b16 %v266
    %v360 = vunpack.c.l.b16 %v267
    %v361 = vunpack.c.h.b16 %v267
    %v362 = vunpack.c.l.b16 %v268
    %v363 = vunpack.c.h.b16 %v268
    %v364 = vunpack.c.l.b16 %v269
    %v365 = vunpack.c.h.b16 %v269
    %v366 = vpack.c.b16 %v306, %v302
    %v367 = vpack.c.b16 %v307, %v303
    %v368 = vpack.c.b16 %v308, %v304
    %v369 = vpack.c.b16 %v309, %v305
    %v370 = vpack.c.b16 %v314, %v310
    %v371 = vpack.c.b16 %v315, %v311
    %v372 = vpack.c.b16 %v316, %v312
    %v373 = vpack.c.b16 %v317, %v313
    %v374 = vpack.c.b16 %v322, %v318
    %v375 = vpack.c.b16 %v323, %v319
    %v376 = vpack.c.b16 %v324, %v320
    %v377 = vpack.c.b16 %v325, %v321
    %v378 = vpack.c.b16 %v330, %v326
    %v379 = vpack.c.b16 %v331, %v327
    %v380 = vpack.c.b16 %v332, %v328
    %v381 = vpack.c.b16 %v333, %v329
    %v382 = vpack.c.b16 %v338, %v334
    %v383 = vpack.c.b16 %v339, %v335
    %v384 = vpack.c.b16 %v340, %v336
    %v385 = vpack.c.b16 %v341, %v337
    %v386 = vpack.c.b16 %v346, %v342
    %v387 = vpack.c.b16 %v347, %v343
    %v388 = vpack.c.b16 %v348, %v344
    %v389 = vpack.c.b16 %v349, %v345
    %v390 = vpack.c.b16 %v354, %v350
    %v391 = vpack.c.b16 %v355, %v351
    %v392 = vpack.c.b16 %v356, %v352
    %v393 = vpack.c.b16 %v357, %v353
    %v394 = vpack.c.b16 %v362, %v358
    %v395 = vpack.c.b16 %v363, %v359
    %v396 = vpack.c.b16 %v364, %v360
    %v397 = vpack.c.b16 %v365, %v361
    %430 = vmatprep.subr.bf16.mxu0 %v367
    %431 = vmatpush1.bf16.msra.mxu0 %v366
    %432 = vmatprep.subr.bf16.mxu0 %v371
    %433 = vmatpush1.bf16.msra.mxu0 %v370
    %434 = vmatprep.subr.bf16.mxu0 %v375
    %435 = vmatpush1.bf16.msra.mxu0 %v374
    %436 = vmatprep.subr.bf16.mxu0 %v379
    %437 = vmatpush1.bf16.msra.mxu0 %v378
    %438 = vmatprep.subr.bf16.mxu0 %v383
    %439 = vmatpush1.bf16.msra.mxu0 %v382
    %440 = vmatprep.subr.bf16.mxu0 %v387
    %441 = vmatpush1.bf16.msra.mxu0 %v386
    %442 = vmatprep.subr.bf16.mxu0 %v391
    %443 = vmatpush1.bf16.msra.mxu0 %v390
    %444 = vmatprep.subr.bf16.mxu0 %v395
    %445 = vmatpush1.bf16.msra.mxu0 %v394
    %446 = vmatprep.subr.bf16.mxu0 0
    %447 = vmatpush1.bf16.msra.mxu0 0
    %448 = vmatprep.subr.bf16.mxu0 0
    %449 = vmatpush1.bf16.msra.mxu0 0
    %450 = vmatprep.subr.bf16.mxu0 0
    %451 = vmatpush1.bf16.msra.mxu0 0
    %452 = vmatprep.subr.bf16.mxu0 0
    %453 = vmatpush1.bf16.msra.mxu0 0
    %454 = vmatprep.subr.bf16.mxu0 0
    %455 = vmatpush1.bf16.msra.mxu0 0
    %456 = vmatprep.subr.bf16.mxu0 0
    %457 = vmatpush1.bf16.msra.mxu0 0
    %458 = vmatprep.subr.bf16.mxu0 0
    %459 = vmatpush1.bf16.msra.mxu0 0
    %460 = vmatprep.subr.bf16.mxu0 0
    %461 = vmatpush1.bf16.msra.mxu0 0
    %462 = vmatprep.mubr.bf16.mxu0 0
    %463 = vmatmul.mubr.bf16.gmra.mrb[0].mxu0 0
    %v464 = vpop.f32.mrb[0].mxu0
    %v465 = vadd.f32 0.0, %v464
    %v466 = vpop.f32.mrb[0].mxu0
    %v467 = vadd.f32 0.0, %v466
    %v468 = vpop.f32.mrb[0].mxu0
    %v469 = vpop.f32.mrb[0].mxu0
    %470 = vdwg.mxu0
    %471 = vmatprep.subr.bf16.mxu0 %v369
    %472 = vmatpush1.bf16.msra.mxu0 %v368
    %473 = vmatprep.subr.bf16.mxu0 %v373
    %474 = vmatpush1.bf16.msra.mxu0 %v372
    %475 = vmatprep.subr.bf16.mxu0 %v377
    %476 = vmatpush1.bf16.msra.mxu0 %v376
    %477 = vmatprep.subr.bf16.mxu0 %v381
    %478 = vmatpush1.bf16.msra.mxu0 %v380
    %479 = vmatprep.subr.bf16.mxu0 %v385
    %480 = vmatpush1.bf16.msra.mxu0 %v384
    %481 = vmatprep.subr.bf16.mxu0 %v389
    %482 = vmatpush1.bf16.msra.mxu0 %v388
    %483 = vmatprep.subr.bf16.mxu0 %v393
    %484 = vmatpush1.bf16.msra.mxu0 %v392
    %485 = vmatprep.subr.bf16.mxu0 %v397
    %486 = vmatpush1.bf16.msra.mxu0 %v396
    %487 = vmatprep.subr.bf16.mxu0 0
    %488 = vmatpush1.bf16.msra.mxu0 0
    %489 = vmatprep.subr.bf16.mxu0 0
    %490 = vmatpush1.bf16.msra.mxu0 0
    %491 = vmatprep.subr.bf16.mxu0 0
    %492 = vmatpush1.bf16.msra.mxu0 0
    %493 = vmatprep.subr.bf16.mxu0 0
    %494 = vmatpush1.bf16.msra.mxu0 0
    %495 = vmatprep.subr.bf16.mxu0 0
    %496 = vmatpush1.bf16.msra.mxu0 0
    %497 = vmatprep.subr.bf16.mxu0 0
    %498 = vmatpush1.bf16.msra.mxu0 0
    %499 = vmatprep.subr.bf16.mxu0 0
    %500 = vmatpush1.bf16.msra.mxu0 0
    %501 = vmatprep.subr.bf16.mxu0 0
    %502 = vmatpush1.bf16.msra.mxu0 0
    %503 = vmatprep.mubr.bf16.mxu0 0
    %504 = vmatmul.mubr.bf16.gmra.mrb[0].mxu0 0
    %v505 = vpop.f32.mrb[0].mxu0
    %v506 = vadd.f32 0.0, %v505
    %v507 = vpop.f32.mrb[0].mxu0
    %v508 = vadd.f32 0.0, %v507
    %v509 = vpop.f32.mrb[0].mxu0
    %v510 = vpop.f32.mrb[0].mxu0
    %511 = vdwg.mxu0
    %v512 = vld [vmem:[#allocation2] sm:$0xff]
    %v513 = vld [vmem:[#allocation2 + $0x8] sm:$0xff]
    %v514 = vadd.f32 %v512, %v465
    %v515 = vadd.f32 %v513, %v467
    %v516 = vmul.f32 %v514, %v222
    %v517 = vmul.f32 %v515, %v223
    %v518 = vtanh.pop %v516
    %v519 = vtanh.pop %v517
    %v520 = vmul.f32 %v518, %v222
    %v521 = vmul.f32 %v519, %v223
    %v522 = vadd.f32 %v520, %v224
    %v523 = vadd.f32 %v521, %v225
    %v524 = vmul.f32 %v522, 0.0
    %v525 = vmul.f32 %v522, %v523
    %527 = vrot.lane.b32.xlu0 %v525, 64
    %v528 = vpop.permute.xlu0 %527
    %v530 = vadd.f32 %v524, %v528
    %v531 = vtanh.pop %v530
    %v532 = vmul.f32 %v523, %v531
    %v533 = vpack.c.bf16 %v532, %v532
    %v534 = vld [vmem:[%s4] sm:$0xff]
    %v535 = vld [vmem:[%s4 + $0x8] sm:$0xff]
    %v536 = vld [vmem:[%s4 + $0x10] sm:$0xff]
    %v537 = vld [vmem:[%s4 + $0x18] sm:$0xff]
    %v538 = vld [vmem:[%s4 + $0x20] sm:$0xff]
    %v539 = vld [vmem:[%s4 + $0x28] sm:$0xff]
    %v540 = vld [vmem:[%s4 + $0x30] sm:$0xff]
    %v541 = vld [vmem:[%s4 + $0x38] sm:$0xff]
    %543 = vrot.lane.b32.xlu0 %v533, 64
    %v544 = vpop.permute.xlu0 %543
    %v553 = vunpack.c.l.b16 %v534
    %v554 = vunpack.c.h.b16 %v534
    %v555 = vunpack.c.l.b16 %v535
    %v556 = vunpack.c.h.b16 %v535
    %v557 = vunpack.c.l.b16 %v536
    %v558 = vunpack.c.h.b16 %v536
    %v559 = vunpack.c.l.b16 %v537
    %v560 = vunpack.c.h.b16 %v537
    %v561 = vunpack.c.l.b16 %v538
    %v562 = vunpack.c.h.b16 %v538
    %v563 = vunpack.c.l.b16 %v539
    %v564 = vunpack.c.h.b16 %v539
    %v565 = vunpack.c.l.b16 %v540
    %v566 = vunpack.c.h.b16 %v540
    %v567 = vunpack.c.l.b16 %v541
    %v568 = vunpack.c.h.b16 %v541
    %v569 = vpack.c.b16 %v555, %v553
    %v570 = vpack.c.b16 %v556, %v554
    %v571 = vpack.c.b16 %v559, %v557
    %v572 = vpack.c.b16 %v560, %v558
    %v573 = vpack.c.b16 %v563, %v561
    %v574 = vpack.c.b16 %v564, %v562
    %v575 = vpack.c.b16 %v567, %v565
    %v576 = vpack.c.b16 %v568, %v566
    %vm585 = vcmask 523264
    %v587 = vsel %vm585, %v544, 0
    %589 = vmatprep.subr.bf16.mxu0 %v570
    %590 = vmatpush1.bf16.msra.mxu0 %v569
    %591 = vmatprep.subr.bf16.mxu0 %v572
    %592 = vmatpush1.bf16.msra.mxu0 %v571
    %593 = vmatprep.subr.bf16.mxu0 %v574
    %594 = vmatpush1.bf16.msra.mxu0 %v573
    %595 = vmatprep.subr.bf16.mxu0 %v576
    %596 = vmatpush1.bf16.msra.mxu0 %v575
    %597 = vmatprep.subr.bf16.mxu0 0
    %598 = vmatpush1.bf16.msra.mxu0 0
    %599 = vmatprep.subr.bf16.mxu0 0
    %600 = vmatpush1.bf16.msra.mxu0 0
    %601 = vmatprep.subr.bf16.mxu0 0
    %602 = vmatpush1.bf16.msra.mxu0 0
    %603 = vmatprep.subr.bf16.mxu0 0
    %604 = vmatpush1.bf16.msra.mxu0 0
    %605 = vmatprep.subr.bf16.mxu0 0
    %606 = vmatpush1.bf16.msra.mxu0 0
    %607 = vmatprep.subr.bf16.mxu0 0
    %608 = vmatpush1.bf16.msra.mxu0 0
    %609 = vmatprep.subr.bf16.mxu0 0
    %610 = vmatpush1.bf16.msra.mxu0 0
    %611 = vmatprep.subr.bf16.mxu0 0
    %612 = vmatpush1.bf16.msra.mxu0 0
    %613 = vmatprep.subr.bf16.mxu0 0
    %614 = vmatpush1.bf16.msra.mxu0 0
    %615 = vmatprep.subr.bf16.mxu0 0
    %616 = vmatpush1.bf16.msra.mxu0 0
    %617 = vmatprep.subr.bf16.mxu0 0
    %618 = vmatpush1.bf16.msra.mxu0 0
    %619 = vmatprep.subr.bf16.mxu0 0
    %620 = vmatpush1.bf16.msra.mxu0 0
    %621 = vmatprep.mubr.bf16.mxu0 0
    %622 = vmatmul.mubr.bf16.gmra.mrb[0].mxu0 %v587
    %v623 = vpop.f32.mrb[0].mxu0
    %v624 = vadd.f32 %v506, %v623
    %v625 = vpop.f32.mrb[0].mxu0
    %v626 = vadd.f32 %v508, %v625
    %v627 = vpop.f32.mrb[0].mxu0
    %v628 = vpop.f32.mrb[0].mxu0
    %629 = vdwg.mxu0
    %v630 = vadd.f32 %v624, %v231
    %v631 = vadd.f32 %v626, %v235
    %v632 = vmul.f32 %v630, %v222
    %v633 = vmul.f32 %v631, %v223
    %v634 = vtanh.pop %v632
    %v635 = vtanh.pop %v633
    %v636 = vmul.f32 %v634, %v222
    %v637 = vmul.f32 %v635, %v223
    %v638 = vadd.f32 %v636, %v224
    %v639 = vadd.f32 %v637, %v225
    %v640 = vmul.f32 %v638, 0.0
    %v641 = vmul.f32 %v638, %v639
    %643 = vrot.lane.b32.xlu0 %v641, 64
    %v644 = vpop.permute.xlu0 %643
    %v646 = vadd.f32 %v640, %v644
    %v647 = vtanh.pop %v646
    %v648 = vmul.f32 %v639, %v647
    %650 = vrot.lane.b32.xlu0 %v532, 64
    %v651 = vpop.permute.xlu0 %650
    %v653 = vsel %vm585, %v651, %v648
    %v654 = vpack.c.bf16 %v653, %v653
    %655 = vmatprep.subr.bf16.mxu0 %v367
    %656 = vmatpush1.bf16.msra.mxu0 %v366
    %657 = vmatprep.subr.bf16.mxu0 %v371
    %658 = vmatpush1.bf16.msra.mxu0 %v370
    %659 = vmatprep.subr.bf16.mxu0 %v375
    %660 = vmatpush1.bf16.msra.mxu0 %v374
    %661 = vmatprep.subr.bf16.mxu0 %v379
    %662 = vmatpush1.bf16.msra.mxu0 %v378
    %663 = vmatprep.subr.bf16.mxu0 %v383
    %664 = vmatpush1.bf16.msra.mxu0 %v382
    %665 = vmatprep.subr.bf16.mxu0 %v387
    %666 = vmatpush1.bf16.msra.mxu0 %v386
    %667 = vmatprep.subr.bf16.mxu0 %v391
    %668 = vmatpush1.bf16.msra.mxu0 %v390
    %669 = vmatprep.subr.bf16.mxu0 %v395
    %670 = vmatpush1.bf16.msra.mxu0 %v394
    %671 = vmatprep.subr.bf16.mxu0 0
    %672 = vmatpush1.bf16.msra.mxu0 0
    %673 = vmatprep.subr.bf16.mxu0 0
    %674 = vmatpush1.bf16.msra.mxu0 0
    %675 = vmatprep.subr.bf16.mxu0 0
    %676 = vmatpush1.bf16.msra.mxu0 0
    %677 = vmatprep.subr.bf16.mxu0 0
    %678 = vmatpush1.bf16.msra.mxu0 0
    %679 = vmatprep.subr.bf16.mxu0 0
    %680 = vmatpush1.bf16.msra.mxu0 0
    %681 = vmatprep.subr.bf16.mxu0 0
    %682 = vmatpush1.bf16.msra.mxu0 0
    %683 = vmatprep.subr.bf16.mxu0 0
    %684 = vmatpush1.bf16.msra.mxu0 0
    %685 = vmatprep.subr.bf16.mxu0 0
    %686 = vmatpush1.bf16.msra.mxu0 0
    %687 = vmatprep.mubr.bf16.mxu0 0
    %688 = vmatmul.mubr.bf16.gmra.mrb[0].mxu0 %v654
    %v689 = vpop.f32.mrb[0].mxu0
    %v690 = vadd.f32 0.0, %v689
    %v691 = vpop.f32.mrb[0].mxu0
    %v692 = vadd.f32 0.0, %v691
    %v693 = vpop.f32.mrb[0].mxu0
    %v694 = vpop.f32.mrb[0].mxu0
    %695 = vdwg.mxu0
    %696 = vmatprep.subr.bf16.mxu0 %v369
    %697 = vmatpush1.bf16.msra.mxu0 %v368
    %698 = vmatprep.subr.bf16.mxu0 %v373
    %699 = vmatpush1.bf16.msra.mxu0 %v372
    %700 = vmatprep.subr.bf16.mxu0 %v377
    %701 = vmatpush1.bf16.msra.mxu0 %v376
    %702 = vmatprep.subr.bf16.mxu0 %v381
    %703 = vmatpush1.bf16.msra.mxu0 %v380
    %704 = vmatprep.subr.bf16.mxu0 %v385
    %705 = vmatpush1.bf16.msra.mxu0 %v384
    %706 = vmatprep.subr.bf16.mxu0 %v389
    %707 = vmatpush1.bf16.msra.mxu0 %v388
    %708 = vmatprep.subr.bf16.mxu0 %v393
    %709 = vmatpush1.bf16.msra.mxu0 %v392
    %710 = vmatprep.subr.bf16.mxu0 %v397
    %711 = vmatpush1.bf16.msra.mxu0 %v396
    %712 = vmatprep.subr.bf16.mxu0 0
    %713 = vmatpush1.bf16.msra.mxu0 0
    %714 = vmatprep.subr.bf16.mxu0 0
    %715 = vmatpush1.bf16.msra.mxu0 0
    %716 = vmatprep.subr.bf16.mxu0 0
    %717 = vmatpush1.bf16.msra.mxu0 0
    %718 = vmatprep.subr.bf16.mxu0 0
    %719 = vmatpush1.bf16.msra.mxu0 0
    %720 = vmatprep.subr.bf16.mxu0 0
    %721 = vmatpush1.bf16.msra.mxu0 0
    %722 = vmatprep.subr.bf16.mxu0 0
    %723 = vmatpush1.bf16.msra.mxu0 0
    %724 = vmatprep.subr.bf16.mxu0 0
    %725 = vmatpush1.bf16.msra.mxu0 0
    %726 = vmatprep.subr.bf16.mxu0 0
    %727 = vmatpush1.bf16.msra.mxu0 0
    %728 = vmatprep.mubr.bf16.mxu0 0
    %729 = vmatmul.mubr.bf16.gmra.mrb[0].mxu0 %v654
    %v730 = vpop.f32.mrb[0].mxu0
    %v731 = vadd.f32 0.0, %v730
    %v732 = vpop.f32.mrb[0].mxu0
    %v733 = vadd.f32 0.0, %v732
    %v734 = vpop.f32.mrb[0].mxu0
    %v735 = vpop.f32.mrb[0].mxu0
    %736 = vdwg.mxu0
    %v737 = vld [vmem:[#allocation2 + $0x10] sm:$0xff]
    %v738 = vld [vmem:[#allocation2 + $0x18] sm:$0xff]
    %v739 = vadd.f32 %v737, %v690
    %v740 = vadd.f32 %v738, %v692
    %v741 = vmul.f32 %v739, %v222
    %v742 = vmul.f32 %v740, %v223
    %v743 = vtanh.pop %v741
    %v744 = vtanh.pop %v742
    %v745 = vmul.f32 %v743, %v222
    %v746 = vmul.f32 %v744, %v223
    %v747 = vadd.f32 %v745, %v224
    %v748 = vadd.f32 %v746, %v225
    %v749 = vmul.f32 %v747, %v530
    %v750 = vmul.f32 %v747, %v748
    %752 = vrot.lane.b32.xlu0 %v750, 64
    %v753 = vpop.permute.xlu0 %752
    %v755 = vadd.f32 %v749, %v753
    %v756 = vtanh.pop %v755
    %v757 = vmul.f32 %v748, %v756
    %v758 = vpack.c.bf16 %v757, %v757
    %760 = vrot.lane.b32.xlu0 %v758, 64
    %v761 = vpop.permute.xlu0 %760
    %v763 = vsel %vm585, %v761, 0
    %765 = vmatprep.subr.bf16.mxu0 %v570
    %766 = vmatpush1.bf16.msra.mxu0 %v569
    %767 = vmatprep.subr.bf16.mxu0 %v572
    %768 = vmatpush1.bf16.msra.mxu0 %v571
    %769 = vmatprep.subr.bf16.mxu0 %v574
    %770 = vmatpush1.bf16.msra.mxu0 %v573
    %771 = vmatprep.subr.bf16.mxu0 %v576
    %772 = vmatpush1.bf16.msra.mxu0 %v575
    %773 = vmatprep.subr.bf16.mxu0 0
    %774 = vmatpush1.bf16.msra.mxu0 0
    %775 = vmatprep.subr.bf16.mxu0 0
    %776 = vmatpush1.bf16.msra.mxu0 0
    %777 = vmatprep.subr.bf16.mxu0 0
    %778 = vmatpush1.bf16.msra.mxu0 0
    %779 = vmatprep.subr.bf16.mxu0 0
    %780 = vmatpush1.bf16.msra.mxu0 0
    %781 = vmatprep.subr.bf16.mxu0 0
    %782 = vmatpush1.bf16.msra.mxu0 0
    %783 = vmatprep.subr.bf16.mxu0 0
    %784 = vmatpush1.bf16.msra.mxu0 0
    %785 = vmatprep.subr.bf16.mxu0 0
    %786 = vmatpush1.bf16.msra.mxu0 0
    %787 = vmatprep.subr.bf16.mxu0 0
    %788 = vmatpush1.bf16.msra.mxu0 0
    %789 = vmatprep.subr.bf16.mxu0 0
    %790 = vmatpush1.bf16.msra.mxu0 0
    %791 = vmatprep.subr.bf16.mxu0 0
    %792 = vmatpush1.bf16.msra.mxu0 0
    %793 = vmatprep.subr.bf16.mxu0 0
    %794 = vmatpush1.bf16.msra.mxu0 0
    %795 = vmatprep.subr.bf16.mxu0 0
    %796 = vmatpush1.bf16.msra.mxu0 0
    %797 = vmatprep.mubr.bf16.mxu0 0
    %798 = vmatmul.mubr.bf16.gmra.mrb[0].mxu0 %v763
    %v799 = vpop.f32.mrb[0].mxu0
    %v800 = vadd.f32 %v731, %v799
    %v801 = vpop.f32.mrb[0].mxu0
    %v802 = vadd.f32 %v733, %v801
    %v803 = vpop.f32.mrb[0].mxu0
    %v804 = vpop.f32.mrb[0].mxu0
    %805 = vdwg.mxu0
    %v806 = vadd.f32 %v800, %v231
    %v807 = vadd.f32 %v802, %v235
    %v808 = vmul.f32 %v806, %v222
    %v809 = vmul.f32 %v807, %v223
    %v810 = vtanh.pop %v808
    %v811 = vtanh.pop %v809
    %v812 = vmul.f32 %v810, %v222
    %v813 = vmul.f32 %v811, %v223
    %v814 = vadd.f32 %v812, %v224
    %v815 = vadd.f32 %v813, %v225
    %v816 = vmul.f32 %v814, %v646
    %v817 = vmul.f32 %v814, %v815
    %819 = vrot.lane.b32.xlu0 %v817, 64
    %v820 = vpop.permute.xlu0 %819
    %v822 = vadd.f32 %v816, %v820
    %v823 = vtanh.pop %v822
    %v824 = vmul.f32 %v815, %v823
    %826 = vrot.lane.b32.xlu0 %v757, 64
    %v827 = vpop.permute.xlu0 %826
    %v829 = vsel %vm585, %v827, %v824
    %v830 = vpack.c.bf16 %v829, %v829
    %831 = vmatprep.subr.bf16.mxu0 %v367
    %832 = vmatpush1.bf16.msra.mxu0 %v366
    %833 = vmatprep.subr.bf16.mxu0 %v371
    %834 = vmatpush1.bf16.msra.mxu0 %v370
    %835 = vmatprep.subr.bf16.mxu0 %v375
    %836 = vmatpush1.bf16.msra.mxu0 %v374
    %837 = vmatprep.subr.bf16.mxu0 %v379
    %838 = vmatpush1.bf16.msra.mxu0 %v378
    %839 = vmatprep.subr.bf16.mxu0 %v383
    %840 = vmatpush1.bf16.msra.mxu0 %v382
    %841 = vmatprep.subr.bf16.mxu0 %v387
    %842 = vmatpush1.bf16.msra.mxu0 %v386
    %843 = vmatprep.subr.bf16.mxu0 %v391
    %844 = vmatpush1.bf16.msra.mxu0 %v390
    %845 = vmatprep.subr.bf16.mxu0 %v395
    %846 = vmatpush1.bf16.msra.mxu0 %v394
    %847 = vmatprep.subr.bf16.mxu0 0
    %848 = vmatpush1.bf16.msra.mxu0 0
    %849 = vmatprep.subr.bf16.mxu0 0
    %850 = vmatpush1.bf16.msra.mxu0 0
    %851 = vmatprep.subr.bf16.mxu0 0
    %852 = vmatpush1.bf16.msra.mxu0 0
    %853 = vmatprep.subr.bf16.mxu0 0
    %854 = vmatpush1.bf16.msra.mxu0 0
    %855 = vmatprep.subr.bf16.mxu0 0
    %856 = vmatpush1.bf16.msra.mxu0 0
    %857 = vmatprep.subr.bf16.mxu0 0
    %858 = vmatpush1.bf16.msra.mxu0 0
    %859 = vmatprep.subr.bf16.mxu0 0
    %860 = vmatpush1.bf16.msra.mxu0 0
    %861 = vmatprep.subr.bf16.mxu0 0
    %862 = vmatpush1.bf16.msra.mxu0 0
    %863 = vmatprep.mubr.bf16.mxu0 0
    %864 = vmatmul.mubr.bf16.gmra.mrb[0].mxu0 %v830
    %v865 = vpop.f32.mrb[0].mxu0
    %v866 = vadd.f32 0.0, %v865
    %v867 = vpop.f32.mrb[0].mxu0
    %v868 = vadd.f32 0.0, %v867
    %v869 = vpop.f32.mrb[0].mxu0
    %v870 = vpop.f32.mrb[0].mxu0
    %871 = vdwg.mxu0
    %872 = vmatprep.subr.bf16.mxu0 %v369
    %873 = vmatpush1.bf16.msra.mxu0 %v368
    %874 = vmatprep.subr.bf16.mxu0 %v373
    %875 = vmatpush1.bf16.msra.mxu0 %v372
    %876 = vmatprep.subr.bf16.mxu0 %v377
    %877 = vmatpush1.bf16.msra.mxu0 %v376
    %878 = vmatprep.subr.bf16.mxu0 %v381
    %879 = vmatpush1.bf16.msra.mxu0 %v380
    %880 = vmatprep.subr.bf16.mxu0 %v385
    %881 = vmatpush1.bf16.msra.mxu0 %v384
    %882 = vmatprep.subr.bf16.mxu0 %v389
    %883 = vmatpush1.bf16.msra.mxu0 %v388
    %884 = vmatprep.subr.bf16.mxu0 %v393
    %885 = vmatpush1.bf16.msra.mxu0 %v392
    %886 = vmatprep.subr.bf16.mxu0 %v397
    %887 = vmatpush1.bf16.msra.mxu0 %v396
    %888 = vmatprep.subr.bf16.mxu0 0
    %889 = vmatpush1.bf16.msra.mxu0 0
    %890 = vmatprep.subr.bf16.mxu0 0
    %891 = vmatpush1.bf16.msra.mxu0 0
    %892 = vmatprep.subr.bf16.mxu0 0
    %893 = vmatpush1.bf16.msra.mxu0 0
    %894 = vmatprep.subr.bf16.mxu0 0
    %895 = vmatpush1.bf16.msra.mxu0 0
    %896 = vmatprep.subr.bf16.mxu0 0
    %897 = vmatpush1.bf16.msra.mxu0 0
    %898 = vmatprep.subr.bf16.mxu0 0
    %899 = vmatpush1.bf16.msra.mxu0 0
    %900 = vmatprep.subr.bf16.mxu0 0
    %901 = vmatpush1.bf16.msra.mxu0 0
    %902 = vmatprep.subr.bf16.mxu0 0
    %903 = vmatpush1.bf16.msra.mxu0 0
    %904 = vmatprep.mubr.bf16.mxu0 0
    %905 = vmatmul.mubr.bf16.gmra.mrb[0].mxu0 %v830
    %v906 = vpop.f32.mrb[0].mxu0
    %v907 = vadd.f32 0.0, %v906
    %v908 = vpop.f32.mrb[0].mxu0
    %v909 = vadd.f32 0.0, %v908
    %v910 = vpop.f32.mrb[0].mxu0
    %v911 = vpop.f32.mrb[0].mxu0
    %912 = vdwg.mxu0
    %v913 = vld [vmem:[#allocation2 + $0x20] sm:$0xff]
    %v914 = vld [vmem:[#allocation2 + $0x28] sm:$0xff]
    %v915 = vadd.f32 %v913, %v866
    %v916 = vadd.f32 %v914, %v868
    %v917 = vmul.f32 %v915, %v222
    %v918 = vmul.f32 %v916, %v223
    %v919 = vtanh.pop %v917
    %v920 = vtanh.pop %v918
    %v921 = vmul.f32 %v919, %v222
    %v922 = vmul.f32 %v920, %v223
    %v923 = vadd.f32 %v921, %v224
    %v924 = vadd.f32 %v922, %v225
    %v925 = vmul.f32 %v923, %v755
    %v926 = vmul.f32 %v923, %v924
    %928 = vrot.lane.b32.xlu0 %v926, 64
    %v929 = vpop.permute.xlu0 %928
    %v931 = vadd.f32 %v925, %v929
    %v932 = vtanh.pop %v931
    %v933 = vmul.f32 %v924, %v932
    %v934 = vpack.c.bf16 %v933, %v933
    %936 = vrot.lane.b32.xlu0 %v934, 64
    %v937 = vpop.permute.xlu0 %936
    %v939 = vsel %vm585, %v937, 0
    %941 = vmatprep.subr.bf16.mxu0 %v570
    %942 = vmatpush1.bf16.msra.mxu0 %v569
    %943 = vmatprep.subr.bf16.mxu0 %v572
    %944 = vmatpush1.bf16.msra.mxu0 %v571
    %945 = vmatprep.subr.bf16.mxu0 %v574
    %946 = vmatpush1.bf16.msra.mxu0 %v573
    %947 = vmatprep.subr.bf16.mxu0 %v576
    %948 = vmatpush1.bf16.msra.mxu0 %v575
    %949 = vmatprep.subr.bf16.mxu0 0
    %950 = vmatpush1.bf16.msra.mxu0 0
    %951 = vmatprep.subr.bf16.mxu0 0
    %952 = vmatpush1.bf16.msra.mxu0 0
    %953 = vmatprep.subr.bf16.mxu0 0
    %954 = vmatpush1.bf16.msra.mxu0 0
    %955 = vmatprep.subr.bf16.mxu0 0
    %956 = vmatpush1.bf16.msra.mxu0 0
    %957 = vmatprep.subr.bf16.mxu0 0
    %958 = vmatpush1.bf16.msra.mxu0 0
    %959 = vmatprep.subr.bf16.mxu0 0
    %960 = vmatpush1.bf16.msra.mxu0 0
    %961 = vmatprep.subr.bf16.mxu0 0
    %962 = vmatpush1.bf16.msra.mxu0 0
    %963 = vmatprep.subr.bf16.mxu0 0
    %964 = vmatpush1.bf16.msra.mxu0 0
    %965 = vmatprep.subr.bf16.mxu0 0
    %966 = vmatpush1.bf16.msra.mxu0 0
    %967 = vmatprep.subr.bf16.mxu0 0
    %968 = vmatpush1.bf16.msra.mxu0 0
    %969 = vmatprep.subr.bf16.mxu0 0
    %970 = vmatpush1.bf16.msra.mxu0 0
    %971 = vmatprep.subr.bf16.mxu0 0
    %972 = vmatpush1.bf16.msra.mxu0 0
    %973 = vmatprep.mubr.bf16.mxu0 0
    %974 = vmatmul.mubr.bf16.gmra.mrb[0].mxu0 %v939
    %v975 = vpop.f32.mrb[0].mxu0
    %v976 = vadd.f32 %v907, %v975
    %v977 = vpop.f32.mrb[0].mxu0
    %v978 = vadd.f32 %v909, %v977
    %v979 = vpop.f32.mrb[0].mxu0
    %v980 = vpop.f32.mrb[0].mxu0
    %981 = vdwg.mxu0
    %v982 = vadd.f32 %v976, %v231
    %v983 = vadd.f32 %v978, %v235
    %v984 = vmul.f32 %v982, %v222
    %v985 = vmul.f32 %v983, %v223
    %v986 = vtanh.pop %v984
    %v987 = vtanh.pop %v985
    %v988 = vmul.f32 %v986, %v222
    %v989 = vmul.f32 %v987, %v223
    %v990 = vadd.f32 %v988, %v224
    %v991 = vadd.f32 %v989, %v225
    %v992 = vmul.f32 %v990, %v822
    %v993 = vmul.f32 %v990, %v991
    %995 = vrot.lane.b32.xlu0 %v993, 64
    %v996 = vpop.permute.xlu0 %995
    %v998 = vadd.f32 %v992, %v996
    %v999 = vtanh.pop %v998
    %v1000 = vmul.f32 %v991, %v999
    %1002 = vrot.lane.b32.xlu0 %v933, 64
    %v1003 = vpop.permute.xlu0 %1002
    %v1005 = vsel %vm585, %v1003, %v1000
    %v1006 = vpack.c.bf16 %v1005, %v1005
    %1007 = vmatprep.subr.bf16.mxu0 %v367
    %1008 = vmatpush1.bf16.msra.mxu0 %v366
    %1009 = vmatprep.subr.bf16.mxu0 %v371
    %1010 = vmatpush1.bf16.msra.mxu0 %v370
    %1011 = vmatprep.subr.bf16.mxu0 %v375
    %1012 = vmatpush1.bf16.msra.mxu0 %v374
    %1013 = vmatprep.subr.bf16.mxu0 %v379
    %1014 = vmatpush1.bf16.msra.mxu0 %v378
    %1015 = vmatprep.subr.bf16.mxu0 %v383
    %1016 = vmatpush1.bf16.msra.mxu0 %v382
    %1017 = vmatprep.subr.bf16.mxu0 %v387
    %1018 = vmatpush1.bf16.msra.mxu0 %v386
    %1019 = vmatprep.subr.bf16.mxu0 %v391
    %1020 = vmatpush1.bf16.msra.mxu0 %v390
    %1021 = vmatprep.subr.bf16.mxu0 %v395
    %1022 = vmatpush1.bf16.msra.mxu0 %v394
    %1023 = vmatprep.subr.bf16.mxu0 0
    %1024 = vmatpush1.bf16.msra.mxu0 0
    %1025 = vmatprep.subr.bf16.mxu0 0
    %1026 = vmatpush1.bf16.msra.mxu0 0
    %1027 = vmatprep.subr.bf16.mxu0 0
    %1028 = vmatpush1.bf16.msra.mxu0 0
    %1029 = vmatprep.subr.bf16.mxu0 0
    %1030 = vmatpush1.bf16.msra.mxu0 0
    %1031 = vmatprep.subr.bf16.mxu0 0
    %1032 = vmatpush1.bf16.msra.mxu0 0
    %1033 = vmatprep.subr.bf16.mxu0 0
    %1034 = vmatpush1.bf16.msra.mxu0 0
    %1035 = vmatprep.subr.bf16.mxu0 0
    %1036 = vmatpush1.bf16.msra.mxu0 0
    %1037 = vmatprep.subr.bf16.mxu0 0
    %1038 = vmatpush1.bf16.msra.mxu0 0
    %1039 = vmatprep.mubr.bf16.mxu0 0
    %1040 = vmatmul.mubr.bf16.gmra.mrb[0].mxu0 %v1006
    %v1041 = vpop.f32.mrb[0].mxu0
    %v1042 = vadd.f32 0.0, %v1041
    %v1043 = vpop.f32.mrb[0].mxu0
    %v1044 = vadd.f32 0.0, %v1043
    %v1045 = vpop.f32.mrb[0].mxu0
    %v1046 = vpop.f32.mrb[0].mxu0
    %1047 = vdwg.mxu0
    %1048 = vmatprep.subr.bf16.mxu0 %v369
    %1049 = vmatpush1.bf16.msra.mxu0 %v368
    %1050 = vmatprep.subr.bf16.mxu0 %v373
    %1051 = vmatpush1.bf16.msra.mxu0 %v372
    %1052 = vmatprep.subr.bf16.mxu0 %v377
    %1053 = vmatpush1.bf16.msra.mxu0 %v376
    %1054 = vmatprep.subr.bf16.mxu0 %v381
    %1055 = vmatpush1.bf16.msra.mxu0 %v380
    %1056 = vmatprep.subr.bf16.mxu0 %v385
    %1057 = vmatpush1.bf16.msra.mxu0 %v384
    %1058 = vmatprep.subr.bf16.mxu0 %v389
    %1059 = vmatpush1.bf16.msra.mxu0 %v388
    %1060 = vmatprep.subr.bf16.mxu0 %v393
    %1061 = vmatpush1.bf16.msra.mxu0 %v392
    %1062 = vmatprep.subr.bf16.mxu0 %v397
    %1063 = vmatpush1.bf16.msra.mxu0 %v396
    %1064 = vmatprep.subr.bf16.mxu0 0
    %1065 = vmatpush1.bf16.msra.mxu0 0
    %1066 = vmatprep.subr.bf16.mxu0 0
    %1067 = vmatpush1.bf16.msra.mxu0 0
    %1068 = vmatprep.subr.bf16.mxu0 0
    %1069 = vmatpush1.bf16.msra.mxu0 0
    %1070 = vmatprep.subr.bf16.mxu0 0
    %1071 = vmatpush1.bf16.msra.mxu0 0
    %1072 = vmatprep.subr.bf16.mxu0 0
    %1073 = vmatpush1.bf16.msra.mxu0 0
    %1074 = vmatprep.subr.bf16.mxu0 0
    %1075 = vmatpush1.bf16.msra.mxu0 0
    %1076 = vmatprep.subr.bf16.mxu0 0
    %1077 = vmatpush1.bf16.msra.mxu0 0
    %1078 = vmatprep.subr.bf16.mxu0 0
    %1079 = vmatpush1.bf16.msra.mxu0 0
    %1080 = vmatprep.mubr.bf16.mxu0 0
    %1081 = vmatmul.mubr.bf16.gmra.mrb[0].mxu0 %v1006
    %v1082 = vpop.f32.mrb[0].mxu0
    %v1083 = vadd.f32 0.0, %v1082
    %v1084 = vpop.f32.mrb[0].mxu0
    %v1085 = vadd.f32 0.0, %v1084
    %v1086 = vpop.f32.mrb[0].mxu0
    %v1087 = vpop.f32.mrb[0].mxu0
    %1088 = vdwg.mxu0
    %v1089 = vld [vmem:[#allocation2 + $0x30] sm:$0xff]
    %v1090 = vld [vmem:[#allocation2 + $0x38] sm:$0xff]
    %v1091 = vadd.f32 %v1089, %v1042
    %v1092 = vadd.f32 %v1090, %v1044
    %v1093 = vmul.f32 %v1091, %v222
    %v1094 = vmul.f32 %v1092, %v223
    %v1095 = vtanh.pop %v1093
    %v1096 = vtanh.pop %v1094
    %v1097 = vmul.f32 %v1095, %v222
    %v1098 = vmul.f32 %v1096, %v223
    %v1099 = vadd.f32 %v1097, %v224
    %v1100 = vadd.f32 %v1098, %v225
    %v1101 = vmul.f32 %v1099, %v931
    %v1102 = vmul.f32 %v1099, %v1100
    %1104 = vrot.lane.b32.xlu0 %v1102, 64
    %v1105 = vpop.permute.xlu0 %1104
    %v1107 = vadd.f32 %v1101, %v1105
    %v1108 = vtanh.pop %v1107
    %v1109 = vmul.f32 %v1100, %v1108
    %v1110 = vpack.c.bf16 %v1109, %v1109
    %1112 = vrot.lane.b32.xlu0 %v1110, 64
    %v1113 = vpop.permute.xlu0 %1112
    %v1115 = vsel %vm585, %v1113, 0
    %1117 = vmatprep.subr.bf16.mxu0 %v570
    %1118 = vmatpush1.bf16.msra.mxu0 %v569
    %1119 = vmatprep.subr.bf16.mxu0 %v572
    %1120 = vmatpush1.bf16.msra.mxu0 %v571
    %1121 = vmatprep.subr.bf16.mxu0 %v574
    %1122 = vmatpush1.bf16.msra.mxu0 %v573
    %1123 = vmatprep.subr.bf16.mxu0 %v576
    %1124 = vmatpush1.bf16.msra.mxu0 %v575
    %1125 = vmatprep.subr.bf16.mxu0 0
    %1126 = vmatpush1.bf16.msra.mxu0 0
    %1127 = vmatprep.subr.bf16.mxu0 0
    %1128 = vmatpush1.bf16.msra.mxu0 0
    %1129 = vmatprep.subr.bf16.mxu0 0
    %1130 = vmatpush1.bf16.msra.mxu0 0
    %1131 = vmatprep.subr.bf16.mxu0 0
    %1132 = vmatpush1.bf16.msra.mxu0 0
    %1133 = vmatprep.subr.bf16.mxu0 0
    %1134 = vmatpush1.bf16.msra.mxu0 0
    %1135 = vmatprep.subr.bf16.mxu0 0
    %1136 = vmatpush1.bf16.msra.mxu0 0
    %1137 = vmatprep.subr.bf16.mxu0 0
    %1138 = vmatpush1.bf16.msra.mxu0 0
    %1139 = vmatprep.subr.bf16.mxu0 0
    %1140 = vmatpush1.bf16.msra.mxu0 0
    %1141 = vmatprep.subr.bf16.mxu0 0
    %1142 = vmatpush1.bf16.msra.mxu0 0
    %1143 = vmatprep.subr.bf16.mxu0 0
    %1144 = vmatpush1.bf16.msra.mxu0 0
    %1145 = vmatprep.subr.bf16.mxu0 0
    %1146 = vmatpush1.bf16.msra.mxu0 0
    %1147 = vmatprep.subr.bf16.mxu0 0
    %1148 = vmatpush1.bf16.msra.mxu0 0
    %1149 = vmatprep.mubr.bf16.mxu0 0
    %1150 = vmatmul.mubr.bf16.gmra.mrb[0].mxu0 %v1115
    %v1151 = vpop.f32.mrb[0].mxu0
    %v1152 = vadd.f32 %v1083, %v1151
    %v1153 = vpop.f32.mrb[0].mxu0
    %v1154 = vadd.f32 %v1085, %v1153
    %v1155 = vpop.f32.mrb[0].mxu0
    %v1156 = vpop.f32.mrb[0].mxu0
    %1157 = vdwg.mxu0
    %v1158 = vadd.f32 %v1152, %v231
    %v1159 = vadd.f32 %v1154, %v235
    %v1160 = vmul.f32 %v1158, %v222
    %v1161 = vmul.f32 %v1159, %v223
    %v1162 = vtanh.pop %v1160
    %v1163 = vtanh.pop %v1161
    %v1164 = vmul.f32 %v1162, %v222
    %v1165 = vmul.f32 %v1163, %v223
    %v1166 = vadd.f32 %v1164, %v224
    %v1167 = vadd.f32 %v1165, %v225
    %v1168 = vmul.f32 %v1166, %v998
    %v1169 = vmul.f32 %v1166, %v1167
    %1171 = vrot.lane.b32.xlu0 %v1169, 64
    %v1172 = vpop.permute.xlu0 %1171
    %v1174 = vadd.f32 %v1168, %v1172
    %v1175 = vtanh.pop %v1174
    %v1176 = vmul.f32 %v1167, %v1175
    %1178 = vrot.lane.b32.xlu0 %v1109, 64
    %v1179 = vpop.permute.xlu0 %1178
    %v1181 = vsel %vm585, %v1179, %v1176
    %v1182 = vpack.c.bf16 %v1181, %v1181
    %1183 = vmatprep.subr.bf16.mxu0 %v367
    %1184 = vmatpush1.bf16.msra.mxu0 %v366
    %1185 = vmatprep.subr.bf16.mxu0 %v371
    %1186 = vmatpush1.bf16.msra.mxu0 %v370
    %1187 = vmatprep.subr.bf16.mxu0 %v375
    %1188 = vmatpush1.bf16.msra.mxu0 %v374
    %1189 = vmatprep.subr.bf16.mxu0 %v379
    %1190 = vmatpush1.bf16.msra.mxu0 %v378
    %1191 = vmatprep.subr.bf16.mxu0 %v383
    %1192 = vmatpush1.bf16.msra.mxu0 %v382
    %1193 = vmatprep.subr.bf16.mxu0 %v387
    %1194 = vmatpush1.bf16.msra.mxu0 %v386
    %1195 = vmatprep.subr.bf16.mxu0 %v391
    %1196 = vmatpush1.bf16.msra.mxu0 %v390
    %1197 = vmatprep.subr.bf16.mxu0 %v395
    %1198 = vmatpush1.bf16.msra.mxu0 %v394
    %1199 = vmatprep.subr.bf16.mxu0 0
    %1200 = vmatpush1.bf16.msra.mxu0 0
    %1201 = vmatprep.subr.bf16.mxu0 0
    %1202 = vmatpush1.bf16.msra.mxu0 0
    %1203 = vmatprep.subr.bf16.mxu0 0
    %1204 = vmatpush1.bf16.msra.mxu0 0
    %1205 = vmatprep.subr.bf16.mxu0 0
    %1206 = vmatpush1.bf16.msra.mxu0 0
    %1207 = vmatprep.subr.bf16.mxu0 0
    %1208 = vmatpush1.bf16.msra.mxu0 0
    %1209 = vmatprep.subr.bf16.mxu0 0
    %1210 = vmatpush1.bf16.msra.mxu0 0
    %1211 = vmatprep.subr.bf16.mxu0 0
    %1212 = vmatpush1.bf16.msra.mxu0 0
    %1213 = vmatprep.subr.bf16.mxu0 0
    %1214 = vmatpush1.bf16.msra.mxu0 0
    %1215 = vmatprep.mubr.bf16.mxu0 0
    %1216 = vmatmul.mubr.bf16.gmra.mrb[0].mxu0 %v1182
    %v1217 = vpop.f32.mrb[0].mxu0
    %v1218 = vadd.f32 0.0, %v1217
    %v1219 = vpop.f32.mrb[0].mxu0
    %v1220 = vadd.f32 0.0, %v1219
    %v1221 = vpop.f32.mrb[0].mxu0
    %v1222 = vpop.f32.mrb[0].mxu0
    %1223 = vdwg.mxu0
    %1224 = vmatprep.subr.bf16.mxu0 %v369
    %1225 = vmatpush1.bf16.msra.mxu0 %v368
    %1226 = vmatprep.subr.bf16.mxu0 %v373
    %1227 = vmatpush1.bf16.msra.mxu0 %v372
    %1228 = vmatprep.subr.bf16.mxu0 %v377
    %1229 = vmatpush1.bf16.msra.mxu0 %v376
    %1230 = vmatprep.subr.bf16.mxu0 %v381
    %1231 = vmatpush1.bf16.msra.mxu0 %v380
    %1232 = vmatprep.subr.bf16.mxu0 %v385
    %1233 = vmatpush1.bf16.msra.mxu0 %v384
    %1234 = vmatprep.subr.bf16.mxu0 %v389
    %1235 = vmatpush1.bf16.msra.mxu0 %v388
    %1236 = vmatprep.subr.bf16.mxu0 %v393
    %1237 = vmatpush1.bf16.msra.mxu0 %v392
    %1238 = vmatprep.subr.bf16.mxu0 %v397
    %1239 = vmatpush1.bf16.msra.mxu0 %v396
    %1240 = vmatprep.subr.bf16.mxu0 0
    %1241 = vmatpush1.bf16.msra.mxu0 0
    %1242 = vmatprep.subr.bf16.mxu0 0
    %1243 = vmatpush1.bf16.msra.mxu0 0
    %1244 = vmatprep.subr.bf16.mxu0 0
    %1245 = vmatpush1.bf16.msra.mxu0 0
    %1246 = vmatprep.subr.bf16.mxu0 0
    %1247 = vmatpush1.bf16.msra.mxu0 0
    %1248 = vmatprep.subr.bf16.mxu0 0
    %1249 = vmatpush1.bf16.msra.mxu0 0
    %1250 = vmatprep.subr.bf16.mxu0 0
    %1251 = vmatpush1.bf16.msra.mxu0 0
    %1252 = vmatprep.subr.bf16.mxu0 0
    %1253 = vmatpush1.bf16.msra.mxu0 0
    %1254 = vmatprep.subr.bf16.mxu0 0
    %1255 = vmatpush1.bf16.msra.mxu0 0
    %1256 = vmatprep.mubr.bf16.mxu0 0
    %1257 = vmatmul.mubr.bf16.gmra.mrb[0].mxu0 %v1182
    %v1258 = vpop.f32.mrb[0].mxu0
    %v1259 = vadd.f32 0.0, %v1258
    %v1260 = vpop.f32.mrb[0].mxu0
    %v1261 = vadd.f32 0.0, %v1260
    %v1262 = vpop.f32.mrb[0].mxu0
    %v1263 = vpop.f32.mrb[0].mxu0
    %1264 = vdwg.mxu0
    %v1265 = vld [vmem:[#allocation2 + $0x40] sm:$0xff]
    %v1266 = vld [vmem:[#allocation2 + $0x48] sm:$0xff]
    %v1267 = vadd.f32 %v1265, %v1218
    %v1268 = vadd.f32 %v1266, %v1220
    %v1269 = vmul.f32 %v1267, %v222
    %v1270 = vmul.f32 %v1268, %v223
    %v1271 = vtanh.pop %v1269
    %v1272 = vtanh.pop %v1270
    %v1273 = vmul.f32 %v1271, %v222
    %v1274 = vmul.f32 %v1272, %v223
    %v1275 = vadd.f32 %v1273, %v224
    %v1276 = vadd.f32 %v1274, %v225
    %v1277 = vmul.f32 %v1275, %v1107
    %v1278 = vmul.f32 %v1275, %v1276
    %1280 = vrot.lane.b32.xlu0 %v1278, 64
    %v1281 = vpop.permute.xlu0 %1280
    %v1283 = vadd.f32 %v1277, %v1281
    %v1284 = vtanh.pop %v1283
    %v1285 = vmul.f32 %v1276, %v1284
    %v1286 = vpack.c.bf16 %v1285, %v1285
    %1288 = vrot.lane.b32.xlu0 %v1286, 64
    %v1289 = vpop.permute.xlu0 %1288
    %v1291 = vsel %vm585, %v1289, 0
    %1293 = vmatprep.subr.bf16.mxu0 %v570
    %1294 = vmatpush1.bf16.msra.mxu0 %v569
    %1295 = vmatprep.subr.bf16.mxu0 %v572
    %1296 = vmatpush1.bf16.msra.mxu0 %v571
    %1297 = vmatprep.subr.bf16.mxu0 %v574
    %1298 = vmatpush1.bf16.msra.mxu0 %v573
    %1299 = vmatprep.subr.bf16.mxu0 %v576
    %1300 = vmatpush1.bf16.msra.mxu0 %v575
    %1301 = vmatprep.subr.bf16.mxu0 0
    %1302 = vmatpush1.bf16.msra.mxu0 0
    %1303 = vmatprep.subr.bf16.mxu0 0
    %1304 = vmatpush1.bf16.msra.mxu0 0
    %1305 = vmatprep.subr.bf16.mxu0 0
    %1306 = vmatpush1.bf16.msra.mxu0 0
    %1307 = vmatprep.subr.bf16.mxu0 0
    %1308 = vmatpush1.bf16.msra.mxu0 0
    %1309 = vmatprep.subr.bf16.mxu0 0
    %1310 = vmatpush1.bf16.msra.mxu0 0
    %1311 = vmatprep.subr.bf16.mxu0 0
    %1312 = vmatpush1.bf16.msra.mxu0 0
    %1313 = vmatprep.subr.bf16.mxu0 0
    %1314 = vmatpush1.bf16.msra.mxu0 0
    %1315 = vmatprep.subr.bf16.mxu0 0
    %1316 = vmatpush1.bf16.msra.mxu0 0
    %1317 = vmatprep.subr.bf16.mxu0 0
    %1318 = vmatpush1.bf16.msra.mxu0 0
    %1319 = vmatprep.subr.bf16.mxu0 0
    %1320 = vmatpush1.bf16.msra.mxu0 0
    %1321 = vmatprep.subr.bf16.mxu0 0
    %1322 = vmatpush1.bf16.msra.mxu0 0
    %1323 = vmatprep.subr.bf16.mxu0 0
    %1324 = vmatpush1.bf16.msra.mxu0 0
    %1325 = vmatprep.mubr.bf16.mxu0 0
    %1326 = vmatmul.mubr.bf16.gmra.mrb[0].mxu0 %v1291
    %v1327 = vpop.f32.mrb[0].mxu0
    %v1328 = vadd.f32 %v1259, %v1327
    %v1329 = vpop.f32.mrb[0].mxu0
    %v1330 = vadd.f32 %v1261, %v1329
    %v1331 = vpop.f32.mrb[0].mxu0
    %v1332 = vpop.f32.mrb[0].mxu0
    %1333 = vdwg.mxu0
    %v1334 = vadd.f32 %v1328, %v231
    %v1335 = vadd.f32 %v1330, %v235
    %v1336 = vmul.f32 %v1334, %v222
    %v1337 = vmul.f32 %v1335, %v223
    %v1338 = vtanh.pop %v1336
    %v1339 = vtanh.pop %v1337
    %v1340 = vmul.f32 %v1338, %v222
    %v1341 = vmul.f32 %v1339, %v223
    %v1342 = vadd.f32 %v1340, %v224
    %v1343 = vadd.f32 %v1341, %v225
    %v1344 = vmul.f32 %v1342, %v1174
    %v1345 = vmul.f32 %v1342, %v1343
    %1347 = vrot.lane.b32.xlu0 %v1345, 64
    %v1348 = vpop.permute.xlu0 %1347
    %v1350 = vadd.f32 %v1344, %v1348
    %v1351 = vtanh.pop %v1350
    %v1352 = vmul.f32 %v1343, %v1351
    %1354 = vrot.lane.b32.xlu0 %v1285, 64
    %v1355 = vpop.permute.xlu0 %1354
    %v1357 = vsel %vm585, %v1355, %v1352
    %v1358 = vpack.c.bf16 %v1357, %v1357
    %1359 = vmatprep.subr.bf16.mxu0 %v367
    %1360 = vmatpush1.bf16.msra.mxu0 %v366
    %1361 = vmatprep.subr.bf16.mxu0 %v371
    %1362 = vmatpush1.bf16.msra.mxu0 %v370
    %1363 = vmatprep.subr.bf16.mxu0 %v375
    %1364 = vmatpush1.bf16.msra.mxu0 %v374
    %1365 = vmatprep.subr.bf16.mxu0 %v379
    %1366 = vmatpush1.bf16.msra.mxu0 %v378
    %1367 = vmatprep.subr.bf16.mxu0 %v383
    %1368 = vmatpush1.bf16.msra.mxu0 %v382
    %1369 = vmatprep.subr.bf16.mxu0 %v387
    %1370 = vmatpush1.bf16.msra.mxu0 %v386
    %1371 = vmatprep.subr.bf16.mxu0 %v391
    %1372 = vmatpush1.bf16.msra.mxu0 %v390
    %1373 = vmatprep.subr.bf16.mxu0 %v395
    %1374 = vmatpush1.bf16.msra.mxu0 %v394
    %1375 = vmatprep.subr.bf16.mxu0 0
    %1376 = vmatpush1.bf16.msra.mxu0 0
    %1377 = vmatprep.subr.bf16.mxu0 0
    %1378 = vmatpush1.bf16.msra.mxu0 0
    %1379 = vmatprep.subr.bf16.mxu0 0
    %1380 = vmatpush1.bf16.msra.mxu0 0
    %1381 = vmatprep.subr.bf16.mxu0 0
    %1382 = vmatpush1.bf16.msra.mxu0 0
    %1383 = vmatprep.subr.bf16.mxu0 0
    %1384 = vmatpush1.bf16.msra.mxu0 0
    %1385 = vmatprep.subr.bf16.mxu0 0
    %1386 = vmatpush1.bf16.msra.mxu0 0
    %1387 = vmatprep.subr.bf16.mxu0 0
    %1388 = vmatpush1.bf16.msra.mxu0 0
    %1389 = vmatprep.subr.bf16.mxu0 0
    %1390 = vmatpush1.bf16.msra.mxu0 0
    %1391 = vmatprep.mubr.bf16.mxu0 0
    %1392 = vmatmul.mubr.bf16.gmra.mrb[0].mxu0 %v1358
    %v1393 = vpop.f32.mrb[0].mxu0
    %v1394 = vadd.f32 0.0, %v1393
    %v1395 = vpop.f32.mrb[0].mxu0
    %v1396 = vadd.f32 0.0, %v1395
    %v1397 = vpop.f32.mrb[0].mxu0
    %v1398 = vpop.f32.mrb[0].mxu0
    %1399 = vdwg.mxu0
    %1400 = vmatprep.subr.bf16.mxu0 %v369
    %1401 = vmatpush1.bf16.msra.mxu0 %v368
    %1402 = vmatprep.subr.bf16.mxu0 %v373
    %1403 = vmatpush1.bf16.msra.mxu0 %v372
    %1404 = vmatprep.subr.bf16.mxu0 %v377
    %1405 = vmatpush1.bf16.msra.mxu0 %v376
    %1406 = vmatprep.subr.bf16.mxu0 %v381
    %1407 = vmatpush1.bf16.msra.mxu0 %v380
    %1408 = vmatprep.subr.bf16.mxu0 %v385
    %1409 = vmatpush1.bf16.msra.mxu0 %v384
    %1410 = vmatprep.subr.bf16.mxu0 %v389
    %1411 = vmatpush1.bf16.msra.mxu0 %v388
    %1412 = vmatprep.subr.bf16.mxu0 %v393
    %1413 = vmatpush1.bf16.msra.mxu0 %v392
    %1414 = vmatprep.subr.bf16.mxu0 %v397
    %1415 = vmatpush1.bf16.msra.mxu0 %v396
    %1416 = vmatprep.subr.bf16.mxu0 0
    %1417 = vmatpush1.bf16.msra.mxu0 0
    %1418 = vmatprep.subr.bf16.mxu0 0
    %1419 = vmatpush1.bf16.msra.mxu0 0
    %1420 = vmatprep.subr.bf16.mxu0 0
    %1421 = vmatpush1.bf16.msra.mxu0 0
    %1422 = vmatprep.subr.bf16.mxu0 0
    %1423 = vmatpush1.bf16.msra.mxu0 0
    %1424 = vmatprep.subr.bf16.mxu0 0
    %1425 = vmatpush1.bf16.msra.mxu0 0
    %1426 = vmatprep.subr.bf16.mxu0 0
    %1427 = vmatpush1.bf16.msra.mxu0 0
    %1428 = vmatprep.subr.bf16.mxu0 0
    %1429 = vmatpush1.bf16.msra.mxu0 0
    %1430 = vmatprep.subr.bf16.mxu0 0
    %1431 = vmatpush1.bf16.msra.mxu0 0
    %1432 = vmatprep.mubr.bf16.mxu0 0
    %1433 = vmatmul.mubr.bf16.gmra.mrb[0].mxu0 %v1358
    %v1434 = vpop.f32.mrb[0].mxu0
    %v1435 = vadd.f32 0.0, %v1434
    %v1436 = vpop.f32.mrb[0].mxu0
    %v1437 = vadd.f32 0.0, %v1436
    %v1438 = vpop.f32.mrb[0].mxu0
    %v1439 = vpop.f32.mrb[0].mxu0
    %1440 = vdwg.mxu0
    %v1441 = vld [vmem:[#allocation2 + $0x50] sm:$0xff]
    %v1442 = vld [vmem:[#allocation2 + $0x58] sm:$0xff]
    %v1443 = vadd.f32 %v1441, %v1394
    %v1444 = vadd.f32 %v1442, %v1396
    %v1445 = vmul.f32 %v1443, %v222
    %v1446 = vmul.f32 %v1444, %v223
    %v1447 = vtanh.pop %v1445
    %v1448 = vtanh.pop %v1446
    %v1449 = vmul.f32 %v1447, %v222
    %v1450 = vmul.f32 %v1448, %v223
    %v1451 = vadd.f32 %v1449, %v224
    %v1452 = vadd.f32 %v1450, %v225
    %v1453 = vmul.f32 %v1451, %v1283
    %v1454 = vmul.f32 %v1451, %v1452
    %1456 = vrot.lane.b32.xlu0 %v1454, 64
    %v1457 = vpop.permute.xlu0 %1456
    %v1459 = vadd.f32 %v1453, %v1457
    %v1460 = vtanh.pop %v1459
    %v1461 = vmul.f32 %v1452, %v1460
    %v1462 = vpack.c.bf16 %v1461, %v1461
    %1464 = vrot.lane.b32.xlu0 %v1462, 64
    %v1465 = vpop.permute.xlu0 %1464
    %v1467 = vsel %vm585, %v1465, 0
    %1469 = vmatprep.subr.bf16.mxu0 %v570
    %1470 = vmatpush1.bf16.msra.mxu0 %v569
    %1471 = vmatprep.subr.bf16.mxu0 %v572
    %1472 = vmatpush1.bf16.msra.mxu0 %v571
    %1473 = vmatprep.subr.bf16.mxu0 %v574
    %1474 = vmatpush1.bf16.msra.mxu0 %v573
    %1475 = vmatprep.subr.bf16.mxu0 %v576
    %1476 = vmatpush1.bf16.msra.mxu0 %v575
    %1477 = vmatprep.subr.bf16.mxu0 0
    %1478 = vmatpush1.bf16.msra.mxu0 0
    %1479 = vmatprep.subr.bf16.mxu0 0
    %1480 = vmatpush1.bf16.msra.mxu0 0
    %1481 = vmatprep.subr.bf16.mxu0 0
    %1482 = vmatpush1.bf16.msra.mxu0 0
    %1483 = vmatprep.subr.bf16.mxu0 0
    %1484 = vmatpush1.bf16.msra.mxu0 0
    %1485 = vmatprep.subr.bf16.mxu0 0
    %1486 = vmatpush1.bf16.msra.mxu0 0
    %1487 = vmatprep.subr.bf16.mxu0 0
    %1488 = vmatpush1.bf16.msra.mxu0 0
    %1489 = vmatprep.subr.bf16.mxu0 0
    %1490 = vmatpush1.bf16.msra.mxu0 0
    %1491 = vmatprep.subr.bf16.mxu0 0
    %1492 = vmatpush1.bf16.msra.mxu0 0
    %1493 = vmatprep.subr.bf16.mxu0 0
    %1494 = vmatpush1.bf16.msra.mxu0 0
    %1495 = vmatprep.subr.bf16.mxu0 0
    %1496 = vmatpush1.bf16.msra.mxu0 0
    %1497 = vmatprep.subr.bf16.mxu0 0
    %1498 = vmatpush1.bf16.msra.mxu0 0
    %1499 = vmatprep.subr.bf16.mxu0 0
    %1500 = vmatpush1.bf16.msra.mxu0 0
    %1501 = vmatprep.mubr.bf16.mxu0 0
    %1502 = vmatmul.mubr.bf16.gmra.mrb[0].mxu0 %v1467
    %v1503 = vpop.f32.mrb[0].mxu0
    %v1504 = vadd.f32 %v1435, %v1503
    %v1505 = vpop.f32.mrb[0].mxu0
    %v1506 = vadd.f32 %v1437, %v1505
    %v1507 = vpop.f32.mrb[0].mxu0
    %v1508 = vpop.f32.mrb[0].mxu0
    %1509 = vdwg.mxu0
    %v1510 = vadd.f32 %v1504, %v231
    %v1511 = vadd.f32 %v1506, %v235
    %v1512 = vmul.f32 %v1510, %v222
    %v1513 = vmul.f32 %v1511, %v223
    %v1514 = vtanh.pop %v1512
    %v1515 = vtanh.pop %v1513
    %v1516 = vmul.f32 %v1514, %v222
    %v1517 = vmul.f32 %v1515, %v223
    %v1518 = vadd.f32 %v1516, %v224
    %v1519 = vadd.f32 %v1517, %v225
    %v1520 = vmul.f32 %v1518, %v1350
    %v1521 = vmul.f32 %v1518, %v1519
    %1523 = vrot.lane.b32.xlu0 %v1521, 64
    %v1524 = vpop.permute.xlu0 %1523
    %v1526 = vadd.f32 %v1520, %v1524
    %v1527 = vtanh.pop %v1526
    %v1528 = vmul.f32 %v1519, %v1527
    %1530 = vrot.lane.b32.xlu0 %v1461, 64
    %v1531 = vpop.permute.xlu0 %1530
    %v1533 = vsel %vm585, %v1531, %v1528
    %v1534 = vpack.c.bf16 %v1533, %v1533
    %1535 = vmatprep.subr.bf16.mxu0 %v367
    %1536 = vmatpush1.bf16.msra.mxu0 %v366
    %1537 = vmatprep.subr.bf16.mxu0 %v371
    %1538 = vmatpush1.bf16.msra.mxu0 %v370
    %1539 = vmatprep.subr.bf16.mxu0 %v375
    %1540 = vmatpush1.bf16.msra.mxu0 %v374
    %1541 = vmatprep.subr.bf16.mxu0 %v379
    %1542 = vmatpush1.bf16.msra.mxu0 %v378
    %1543 = vmatprep.subr.bf16.mxu0 %v383
    %1544 = vmatpush1.bf16.msra.mxu0 %v382
    %1545 = vmatprep.subr.bf16.mxu0 %v387
    %1546 = vmatpush1.bf16.msra.mxu0 %v386
    %1547 = vmatprep.subr.bf16.mxu0 %v391
    %1548 = vmatpush1.bf16.msra.mxu0 %v390
    %1549 = vmatprep.subr.bf16.mxu0 %v395
    %1550 = vmatpush1.bf16.msra.mxu0 %v394
    %1551 = vmatprep.subr.bf16.mxu0 0
    %1552 = vmatpush1.bf16.msra.mxu0 0
    %1553 = vmatprep.subr.bf16.mxu0 0
    %1554 = vmatpush1.bf16.msra.mxu0 0
    %1555 = vmatprep.subr.bf16.mxu0 0
    %1556 = vmatpush1.bf16.msra.mxu0 0
    %1557 = vmatprep.subr.bf16.mxu0 0
    %1558 = vmatpush1.bf16.msra.mxu0 0
    %1559 = vmatprep.subr.bf16.mxu0 0
    %1560 = vmatpush1.bf16.msra.mxu0 0
    %1561 = vmatprep.subr.bf16.mxu0 0
    %1562 = vmatpush1.bf16.msra.mxu0 0
    %1563 = vmatprep.subr.bf16.mxu0 0
    %1564 = vmatpush1.bf16.msra.mxu0 0
    %1565 = vmatprep.subr.bf16.mxu0 0
    %1566 = vmatpush1.bf16.msra.mxu0 0
    %1567 = vmatprep.mubr.bf16.mxu0 0
    %1568 = vmatmul.mubr.bf16.gmra.mrb[0].mxu0 %v1534
    %v1569 = vpop.f32.mrb[0].mxu0
    %v1570 = vadd.f32 0.0, %v1569
    %v1571 = vpop.f32.mrb[0].mxu0
    %v1572 = vadd.f32 0.0, %v1571
    %v1573 = vpop.f32.mrb[0].mxu0
    %v1574 = vpop.f32.mrb[0].mxu0
    %1575 = vdwg.mxu0
    %1576 = vmatprep.subr.bf16.mxu0 %v369
    %1577 = vmatpush1.bf16.msra.mxu0 %v368
    %1578 = vmatprep.subr.bf16.mxu0 %v373
    %1579 = vmatpush1.bf16.msra.mxu0 %v372
    %1580 = vmatprep.subr.bf16.mxu0 %v377
    %1581 = vmatpush1.bf16.msra.mxu0 %v376
    %1582 = vmatprep.subr.bf16.mxu0 %v381
    %1583 = vmatpush1.bf16.msra.mxu0 %v380
    %1584 = vmatprep.subr.bf16.mxu0 %v385
    %1585 = vmatpush1.bf16.msra.mxu0 %v384
    %1586 = vmatprep.subr.bf16.mxu0 %v389
    %1587 = vmatpush1.bf16.msra.mxu0 %v388
    %1588 = vmatprep.subr.bf16.mxu0 %v393
    %1589 = vmatpush1.bf16.msra.mxu0 %v392
    %1590 = vmatprep.subr.bf16.mxu0 %v397
    %1591 = vmatpush1.bf16.msra.mxu0 %v396
    %1592 = vmatprep.subr.bf16.mxu0 0
    %1593 = vmatpush1.bf16.msra.mxu0 0
    %1594 = vmatprep.subr.bf16.mxu0 0
    %1595 = vmatpush1.bf16.msra.mxu0 0
    %1596 = vmatprep.subr.bf16.mxu0 0
    %1597 = vmatpush1.bf16.msra.mxu0 0
    %1598 = vmatprep.subr.bf16.mxu0 0
    %1599 = vmatpush1.bf16.msra.mxu0 0
    %1600 = vmatprep.subr.bf16.mxu0 0
    %1601 = vmatpush1.bf16.msra.mxu0 0
    %1602 = vmatprep.subr.bf16.mxu0 0
    %1603 = vmatpush1.bf16.msra.mxu0 0
    %1604 = vmatprep.subr.bf16.mxu0 0
    %1605 = vmatpush1.bf16.msra.mxu0 0
    %1606 = vmatprep.subr.bf16.mxu0 0
    %1607 = vmatpush1.bf16.msra.mxu0 0
    %1608 = vmatprep.mubr.bf16.mxu0 0
    %1609 = vmatmul.mubr.bf16.gmra.mrb[0].mxu0 %v1534
    %v1610 = vpop.f32.mrb[0].mxu0
    %v1611 = vadd.f32 0.0, %v1610
    %v1612 = vpop.f32.mrb[0].mxu0
    %v1613 = vadd.f32 0.0, %v1612
    %v1614 = vpop.f32.mrb[0].mxu0
    %v1615 = vpop.f32.mrb[0].mxu0
    %1616 = vdwg.mxu0
    %v1617 = vld [vmem:[#allocation2 + $0x60] sm:$0xff]
    %v1618 = vld [vmem:[#allocation2 + $0x68] sm:$0xff]
    %v1619 = vadd.f32 %v1617, %v1570
    %v1620 = vadd.f32 %v1618, %v1572
    %v1621 = vmul.f32 %v1619, %v222
    %v1622 = vmul.f32 %v1620, %v223
    %v1623 = vtanh.pop %v1621
    %v1624 = vtanh.pop %v1622
    %v1625 = vmul.f32 %v1623, %v222
    %v1626 = vmul.f32 %v1624, %v223
    %v1627 = vadd.f32 %v1625, %v224
    %v1628 = vadd.f32 %v1626, %v225
    %v1629 = vmul.f32 %v1627, %v1459
    %v1630 = vmul.f32 %v1627, %v1628
    %1632 = vrot.lane.b32.xlu0 %v1630, 64
    %v1633 = vpop.permute.xlu0 %1632
    %v1635 = vadd.f32 %v1629, %v1633
    %v1636 = vtanh.pop %v1635
    %v1637 = vmul.f32 %v1628, %v1636
    %v1638 = vpack.c.bf16 %v1637, %v1637
    %1640 = vrot.lane.b32.xlu0 %v1638, 64
    %v1641 = vpop.permute.xlu0 %1640
    %v1643 = vsel %vm585, %v1641, 0
    %1645 = vmatprep.subr.bf16.mxu0 %v570
    %1646 = vmatpush1.bf16.msra.mxu0 %v569
    %1647 = vmatprep.subr.bf16.mxu0 %v572
    %1648 = vmatpush1.bf16.msra.mxu0 %v571
    %1649 = vmatprep.subr.bf16.mxu0 %v574
    %1650 = vmatpush1.bf16.msra.mxu0 %v573
    %1651 = vmatprep.subr.bf16.mxu0 %v576
    %1652 = vmatpush1.bf16.msra.mxu0 %v575
    %1653 = vmatprep.subr.bf16.mxu0 0
    %1654 = vmatpush1.bf16.msra.mxu0 0
    %1655 = vmatprep.subr.bf16.mxu0 0
    %1656 = vmatpush1.bf16.msra.mxu0 0
    %1657 = vmatprep.subr.bf16.mxu0 0
    %1658 = vmatpush1.bf16.msra.mxu0 0
    %1659 = vmatprep.subr.bf16.mxu0 0
    %1660 = vmatpush1.bf16.msra.mxu0 0
    %1661 = vmatprep.subr.bf16.mxu0 0
    %1662 = vmatpush1.bf16.msra.mxu0 0
    %1663 = vmatprep.subr.bf16.mxu0 0
    %1664 = vmatpush1.bf16.msra.mxu0 0
    %1665 = vmatprep.subr.bf16.mxu0 0
    %1666 = vmatpush1.bf16.msra.mxu0 0
    %1667 = vmatprep.subr.bf16.mxu0 0
    %1668 = vmatpush1.bf16.msra.mxu0 0
    %1669 = vmatprep.subr.bf16.mxu0 0
    %1670 = vmatpush1.bf16.msra.mxu0 0
    %1671 = vmatprep.subr.bf16.mxu0 0
    %1672 = vmatpush1.bf16.msra.mxu0 0
    %1673 = vmatprep.subr.bf16.mxu0 0
    %1674 = vmatpush1.bf16.msra.mxu0 0
    %1675 = vmatprep.subr.bf16.mxu0 0
    %1676 = vmatpush1.bf16.msra.mxu0 0
    %1677 = vmatprep.mubr.bf16.mxu0 0
    %1678 = vmatmul.mubr.bf16.gmra.mrb[0].mxu0 %v1643
    %v1679 = vpop.f32.mrb[0].mxu0
    %v1680 = vadd.f32 %v1611, %v1679
    %v1681 = vpop.f32.mrb[0].mxu0
    %v1682 = vadd.f32 %v1613, %v1681
    %v1683 = vpop.f32.mrb[0].mxu0
    %v1684 = vpop.f32.mrb[0].mxu0
    %1685 = vdwg.mxu0
    %v1686 = vadd.f32 %v1680, %v231
    %v1687 = vadd.f32 %v1682, %v235
    %v1688 = vmul.f32 %v1686, %v222
    %v1689 = vmul.f32 %v1687, %v223
    %v1690 = vtanh.pop %v1688
    %v1691 = vtanh.pop %v1689
    %v1692 = vmul.f32 %v1690, %v222
    %v1693 = vmul.f32 %v1691, %v223
    %v1694 = vadd.f32 %v1692, %v224
    %v1695 = vadd.f32 %v1693, %v225
    %v1696 = vmul.f32 %v1694, %v1526
    %v1697 = vmul.f32 %v1694, %v1695
    %1699 = vrot.lane.b32.xlu0 %v1697, 64
    %v1700 = vpop.permute.xlu0 %1699
    %v1702 = vadd.f32 %v1696, %v1700
    %v1703 = vtanh.pop %v1702
    %v1704 = vmul.f32 %v1695, %v1703
    %1706 = vrot.lane.b32.xlu0 %v1637, 64
    %v1707 = vpop.permute.xlu0 %1706
    %v1709 = vsel %vm585, %v1707, %v1704
    %v1710 = vpack.c.bf16 %v1709, %v1709
    %1711 = vmatprep.subr.bf16.mxu0 %v367
    %1712 = vmatpush1.bf16.msra.mxu0 %v366
    %1713 = vmatprep.subr.bf16.mxu0 %v371
    %1714 = vmatpush1.bf16.msra.mxu0 %v370
    %1715 = vmatprep.subr.bf16.mxu0 %v375
    %1716 = vmatpush1.bf16.msra.mxu0 %v374
    %1717 = vmatprep.subr.bf16.mxu0 %v379
    %1718 = vmatpush1.bf16.msra.mxu0 %v378
    %1719 = vmatprep.subr.bf16.mxu0 %v383
    %1720 = vmatpush1.bf16.msra.mxu0 %v382
    %1721 = vmatprep.subr.bf16.mxu0 %v387
    %1722 = vmatpush1.bf16.msra.mxu0 %v386
    %1723 = vmatprep.subr.bf16.mxu0 %v391
    %1724 = vmatpush1.bf16.msra.mxu0 %v390
    %1725 = vmatprep.subr.bf16.mxu0 %v395
    %1726 = vmatpush1.bf16.msra.mxu0 %v394
    %1727 = vmatprep.subr.bf16.mxu0 0
    %1728 = vmatpush1.bf16.msra.mxu0 0
    %1729 = vmatprep.subr.bf16.mxu0 0
    %1730 = vmatpush1.bf16.msra.mxu0 0
    %1731 = vmatprep.subr.bf16.mxu0 0
    %1732 = vmatpush1.bf16.msra.mxu0 0
    %1733 = vmatprep.subr.bf16.mxu0 0
    %1734 = vmatpush1.bf16.msra.mxu0 0
    %1735 = vmatprep.subr.bf16.mxu0 0
    %1736 = vmatpush1.bf16.msra.mxu0 0
    %1737 = vmatprep.subr.bf16.mxu0 0
    %1738 = vmatpush1.bf16.msra.mxu0 0
    %1739 = vmatprep.subr.bf16.mxu0 0
    %1740 = vmatpush1.bf16.msra.mxu0 0
    %1741 = vmatprep.subr.bf16.mxu0 0
    %1742 = vmatpush1.bf16.msra.mxu0 0
    %1743 = vmatprep.mubr.bf16.mxu0 0
    %1744 = vmatmul.mubr.bf16.gmra.mrb[0].mxu0 %v1710
    %v1745 = vpop.f32.mrb[0].mxu0
    %v1746 = vadd.f32 0.0, %v1745
    %v1747 = vpop.f32.mrb[0].mxu0
    %v1748 = vadd.f32 0.0, %v1747
    %v1749 = vpop.f32.mrb[0].mxu0
    %v1750 = vpop.f32.mrb[0].mxu0
    %1751 = vdwg.mxu0
    %1752 = vmatprep.subr.bf16.mxu0 %v369
    %1753 = vmatpush1.bf16.msra.mxu0 %v368
    %1754 = vmatprep.subr.bf16.mxu0 %v373
    %1755 = vmatpush1.bf16.msra.mxu0 %v372
    %1756 = vmatprep.subr.bf16.mxu0 %v377
    %1757 = vmatpush1.bf16.msra.mxu0 %v376
    %1758 = vmatprep.subr.bf16.mxu0 %v381
    %1759 = vmatpush1.bf16.msra.mxu0 %v380
    %1760 = vmatprep.subr.bf16.mxu0 %v385
    %1761 = vmatpush1.bf16.msra.mxu0 %v384
    %1762 = vmatprep.subr.bf16.mxu0 %v389
    %1763 = vmatpush1.bf16.msra.mxu0 %v388
    %1764 = vmatprep.subr.bf16.mxu0 %v393
    %1765 = vmatpush1.bf16.msra.mxu0 %v392
    %1766 = vmatprep.subr.bf16.mxu0 %v397
    %1767 = vmatpush1.bf16.msra.mxu0 %v396
    %1768 = vmatprep.subr.bf16.mxu0 0
    %1769 = vmatpush1.bf16.msra.mxu0 0
    %1770 = vmatprep.subr.bf16.mxu0 0
    %1771 = vmatpush1.bf16.msra.mxu0 0
    %1772 = vmatprep.subr.bf16.mxu0 0
    %1773 = vmatpush1.bf16.msra.mxu0 0
    %1774 = vmatprep.subr.bf16.mxu0 0
    %1775 = vmatpush1.bf16.msra.mxu0 0
    %1776 = vmatprep.subr.bf16.mxu0 0
    %1777 = vmatpush1.bf16.msra.mxu0 0
    %1778 = vmatprep.subr.bf16.mxu0 0
    %1779 = vmatpush1.bf16.msra.mxu0 0
    %1780 = vmatprep.subr.bf16.mxu0 0
    %1781 = vmatpush1.bf16.msra.mxu0 0
    %1782 = vmatprep.subr.bf16.mxu0 0
    %1783 = vmatpush1.bf16.msra.mxu0 0
    %1784 = vmatprep.mubr.bf16.mxu0 0
    %1785 = vmatmul.mubr.bf16.gmra.mrb[0].mxu0 %v1710
    %v1786 = vpop.f32.mrb[0].mxu0
    %v1787 = vadd.f32 0.0, %v1786
    %v1788 = vpop.f32.mrb[0].mxu0
    %v1789 = vadd.f32 0.0, %v1788
    %v1790 = vpop.f32.mrb[0].mxu0
    %v1791 = vpop.f32.mrb[0].mxu0
    %1792 = vdwg.mxu0
    %v1793 = vld [vmem:[#allocation2 + $0x70] sm:$0xff]
    %v1794 = vld [vmem:[#allocation2 + $0x78] sm:$0xff]
    %v1795 = vadd.f32 %v1793, %v1746
    %v1796 = vadd.f32 %v1794, %v1748
    %v1797 = vmul.f32 %v1795, %v222
    %v1798 = vmul.f32 %v1796, %v223
    %v1799 = vtanh.pop %v1797
    %v1800 = vtanh.pop %v1798
    %v1801 = vmul.f32 %v1799, %v222
    %v1802 = vmul.f32 %v1800, %v223
    %v1803 = vadd.f32 %v1801, %v224
    %v1804 = vadd.f32 %v1802, %v225
    %v1805 = vmul.f32 %v1803, %v1635
    %v1806 = vmul.f32 %v1803, %v1804
    %1808 = vrot.lane.b32.xlu0 %v1806, 64
    %v1809 = vpop.permute.xlu0 %1808
    %v1811 = vadd.f32 %v1805, %v1809
    %v1812 = vtanh.pop %v1811
    %v1813 = vmul.f32 %v1804, %v1812
    %v1814 = vpack.c.bf16 %v1813, %v1813
    %1816 = vrot.lane.b32.xlu0 %v1814, 64
    %v1817 = vpop.permute.xlu0 %1816
    %v1819 = vsel %vm585, %v1817, 0
    %1821 = vmatprep.subr.bf16.mxu0 %v570
    %1822 = vmatpush1.bf16.msra.mxu0 %v569
    %1823 = vmatprep.subr.bf16.mxu0 %v572
    %1824 = vmatpush1.bf16.msra.mxu0 %v571
    %1825 = vmatprep.subr.bf16.mxu0 %v574
    %1826 = vmatpush1.bf16.msra.mxu0 %v573
    %1827 = vmatprep.subr.bf16.mxu0 %v576
    %1828 = vmatpush1.bf16.msra.mxu0 %v575
    %1829 = vmatprep.subr.bf16.mxu0 0
    %1830 = vmatpush1.bf16.msra.mxu0 0
    %1831 = vmatprep.subr.bf16.mxu0 0
    %1832 = vmatpush1.bf16.msra.mxu0 0
    %1833 = vmatprep.subr.bf16.mxu0 0
    %1834 = vmatpush1.bf16.msra.mxu0 0
    %1835 = vmatprep.subr.bf16.mxu0 0
    %1836 = vmatpush1.bf16.msra.mxu0 0
    %1837 = vmatprep.subr.bf16.mxu0 0
    %1838 = vmatpush1.bf16.msra.mxu0 0
    %1839 = vmatprep.subr.bf16.mxu0 0
    %1840 = vmatpush1.bf16.msra.mxu0 0
    %1841 = vmatprep.subr.bf16.mxu0 0
    %1842 = vmatpush1.bf16.msra.mxu0 0
    %1843 = vmatprep.subr.bf16.mxu0 0
    %1844 = vmatpush1.bf16.msra.mxu0 0
    %1845 = vmatprep.subr.bf16.mxu0 0
    %1846 = vmatpush1.bf16.msra.mxu0 0
    %1847 = vmatprep.subr.bf16.mxu0 0
    %1848 = vmatpush1.bf16.msra.mxu0 0
    %1849 = vmatprep.subr.bf16.mxu0 0
    %1850 = vmatpush1.bf16.msra.mxu0 0
    %1851 = vmatprep.subr.bf16.mxu0 0
    %1852 = vmatpush1.bf16.msra.mxu0 0
    %1853 = vmatprep.mubr.bf16.mxu0 0
    %1854 = vmatmul.mubr.bf16.gmra.mrb[0].mxu0 %v1819
    %v1855 = vpop.f32.mrb[0].mxu0
    %v1856 = vadd.f32 %v1787, %v1855
    %v1857 = vpop.f32.mrb[0].mxu0
    %v1858 = vadd.f32 %v1789, %v1857
    %v1859 = vpop.f32.mrb[0].mxu0
    %v1860 = vpop.f32.mrb[0].mxu0
    %1861 = vdwg.mxu0
    %v1862 = vadd.f32 %v1856, %v231
    %v1863 = vadd.f32 %v1858, %v235
    %v1864 = vmul.f32 %v1862, %v222
    %v1865 = vmul.f32 %v1863, %v223
    %v1866 = vtanh.pop %v1864
    %v1867 = vtanh.pop %v1865
    %v1868 = vmul.f32 %v1866, %v222
    %v1869 = vmul.f32 %v1867, %v223
    %v1870 = vadd.f32 %v1868, %v224
    %v1871 = vadd.f32 %v1869, %v225
    %v1872 = vmul.f32 %v1870, %v1702
    %v1873 = vmul.f32 %v1870, %v1871
    %1875 = vrot.lane.b32.xlu0 %v1873, 64
    %v1876 = vpop.permute.xlu0 %1875
    %v1878 = vadd.f32 %v1872, %v1876
    %v1879 = vtanh.pop %v1878
    %v1880 = vmul.f32 %v1871, %v1879
    %v1881 = vpack.c.bf16 %v1880, %v1880
    %v1882 = vld [vmem:[#allocation5] sm:$0xf]
    %v1883 = vld [vmem:[#allocation5 + $0x4] sm:$0xf]
    %v1884 = vld [vmem:[#allocation5 + $0x8] sm:$0xf]
    %v1885 = vld [vmem:[#allocation5 + $0xc] sm:$0xf]
    %v1886 = vld [vmem:[#allocation5 + $0x10] sm:$0xf]
    %v1887 = vld [vmem:[#allocation5 + $0x14] sm:$0xf]
    %v1888 = vld [vmem:[#allocation5 + $0x18] sm:$0xf]
    %v1889 = vld [vmem:[#allocation5 + $0x1c] sm:$0xf]
    %v1890 = vld [vmem:[%s7] sm:$0x1]
    %v1892 = vlaneseq
    %v1893 = vshrl.u32 %v1892, 7
    %v1894 = vsub.s32 0, %v1893
    %v1895 = vrot.slane %v1890, %v1894
    %1898 = vrot.lane.b32.xlu0 %v1881, 64
    %v1899 = vpop.permute.xlu0 %1898
    %v1908 = vunpack.c.l.b16 %v1882
    %v1909 = vunpack.c.l.b16 %v1883
    %v1910 = vunpack.c.l.b16 %v1884
    %v1911 = vunpack.c.l.b16 %v1885
    %v1912 = vunpack.c.l.b16 %v1886
    %v1913 = vunpack.c.l.b16 %v1887
    %v1914 = vunpack.c.l.b16 %v1888
    %v1915 = vunpack.c.l.b16 %v1889
    %v1916 = vpack.c.b16 %v1909, %v1908
    %v1917 = vpack.c.b16 %v1911, %v1910
    %v1918 = vpack.c.b16 %v1913, %v1912
    %v1919 = vpack.c.b16 %v1915, %v1914
    %v1925 = vsel %vm585, %v1899, 0
    %1927 = vmatprep.subr.bf16.mxu0 0
    %1928 = vmatpush1.bf16.msra.mxu0 %v1916
    %1929 = vmatprep.subr.bf16.mxu0 0
    %1930 = vmatpush1.bf16.msra.mxu0 %v1917
    %1931 = vmatprep.subr.bf16.mxu0 0
    %1932 = vmatpush1.bf16.msra.mxu0 %v1918
    %1933 = vmatprep.subr.bf16.mxu0 0
    %1934 = vmatpush1.bf16.msra.mxu0 %v1919
    %1935 = vmatprep.subr.bf16.mxu0 0
    %1936 = vmatpush1.bf16.msra.mxu0 0
    %1937 = vmatprep.subr.bf16.mxu0 0
    %1938 = vmatpush1.bf16.msra.mxu0 0
    %1939 = vmatprep.subr.bf16.mxu0 0
    %1940 = vmatpush1.bf16.msra.mxu0 0
    %1941 = vmatprep.subr.bf16.mxu0 0
    %1942 = vmatpush1.bf16.msra.mxu0 0
    %1943 = vmatprep.subr.bf16.mxu0 0
    %1944 = vmatpush1.bf16.msra.mxu0 0
    %1945 = vmatprep.subr.bf16.mxu0 0
    %1946 = vmatpush1.bf16.msra.mxu0 0
    %1947 = vmatprep.subr.bf16.mxu0 0
    %1948 = vmatpush1.bf16.msra.mxu0 0
    %1949 = vmatprep.subr.bf16.mxu0 0
    %1950 = vmatpush1.bf16.msra.mxu0 0
    %1951 = vmatprep.subr.bf16.mxu0 0
    %1952 = vmatpush1.bf16.msra.mxu0 0
    %1953 = vmatprep.subr.bf16.mxu0 0
    %1954 = vmatpush1.bf16.msra.mxu0 0
    %1955 = vmatprep.subr.bf16.mxu0 0
    %1956 = vmatpush1.bf16.msra.mxu0 0
    %1957 = vmatprep.subr.bf16.mxu0 0
    %1958 = vmatpush1.bf16.msra.mxu0 0
    %1959 = vmatprep.mubr.bf16.mxu0 0
    %1960 = vmatmul.mubr.bf16.gmra.mrb[0].mxu0 %v1925
    %v1961 = vpop.f32.mrb[0].mxu0
    %v1962 = vadd.f32 %v1895, %v1961
    %v1963 = vpop.f32.mrb[0].mxu0
    %v1964 = vpop.f32.mrb[0].mxu0
    %v1965 = vpop.f32.mrb[0].mxu0
    %1966 = vdwg.mxu0
    %1967 = vst [vmem:[%s8] sm:$0xff] %v1962
    // Predicated region
    $region42: #{lstm_predictor_forward.1} parent=1 // pred_check
      _
    $region43: #{lstm_predictor_forward.1} parent=1 // pred_check_branch
      %1969 = sbr.rel (0) target = $region45
    $region44: #{lstm_predictor_forward.1} parent=1 // pred_region
      _
    $region45: #{lstm_predictor_forward.1} parent=1 // pred_fallthru
      _
    // Predicated region
    $region46: #{lstm_predictor_forward.1} parent=1 // pred_check
      _
    $region47: #{lstm_predictor_forward.1} parent=1 // pred_check_branch
      %1971 = sbr.rel (0) target = $region49
    $region48: #{lstm_predictor_forward.1} parent=1 // pred_region
      _
    $region49: #{lstm_predictor_forward.1} parent=1 // pred_fallthru
      _
    %1972 = vsyncpa [#allocation4], 1
    %1973 = vsyncpa [#allocation6], 1

</llo_original>
